<compile_context>
chip_gen: v7x
topology: tpu7x:2x2x1
jax: 0.10.0
libtpu: 0.0.40
codegen_flags: <defaults>
</compile_context>

<pallas_src>
import jax
import jax.numpy as jnp
import numpy as np
from jax.experimental import pallas as pl
from jax.experimental.pallas import tpu as pltpu

# ----------------------------- model sizes (small, consistent with forward) --
N_NODES = 12
IN_FEATS = 32
N_HIDDEN = 32
N_OBJECTS = 10
N_STATES = 5
N_ETYPES = 3
SBERT_VECTOR_SIZE = 48
PRETRAINED_VECTOR_SIZE = 40
N_RELATIONS = 8                      # len(all_relations); action head = N_RELATIONS + 1
N_ACTIONS = N_RELATIONS + 1
N_GOAL_OBJ = 4
GUMBEL_TAU = 0.01
LANES = 128

# decode-head fused widths
DEC_W = N_ACTIONS + 2 * N_OBJECTS + N_STATES          # 34 per branch (final-part)
DEC_ACT_W = 2 * N_OBJECTS + N_STATES                  # 25 per branch (oh_act-part)
DEC_P1_W = N_OBJECTS + N_STATES                       # 15 per branch (oh_pred1-part)


# ----------------------------- packed parameter slab layout -------------------
def _make_layout():
    layout = {}
    off = 0

    def reg(name, nrows, ncols):
        nonlocal off
        layout[name] = (off, nrows, ncols)
        off += ((nrows + 7) // 8) * 8          # 8-sublane aligned entries

    reg("gcn_w", IN_FEATS, N_ETYPES * N_HIDDEN)
    reg("gcn_b", 1, N_ETYPES * N_HIDDEN)
    reg("gcn_gw", IN_FEATS, N_ETYPES)
    reg("gcn_gb", 1, N_ETYPES)
    reg("embed_w", LANES, N_HIDDEN)            # rows 0:48 sbert, 48:88 conceptnet
    reg("embed_b", 8, N_HIDDEN)                # row 0 sbert_b, rows 1:5 cnet_b
    reg("gemb_w", N_HIDDEN, N_HIDDEN)
    reg("gemb_b", 1, N_HIDDEN)
    reg("goattn_w", 2, N_HIDDEN)
    reg("goattn_b", 1, 1)
    reg("lstm_w", 2 * N_HIDDEN, 4 * N_HIDDEN)
    reg("lstm_b", 1, 4 * N_HIDDEN)
    reg("fc_w", 4 * N_HIDDEN, N_HIDDEN)
    reg("fc_b", 1, N_HIDDEN)
    reg("dec_final_w", N_HIDDEN, 2 * DEC_W)
    reg("dec_final_b", 1, 2 * DEC_W)
    reg("dec_act_w", 2 * N_ACTIONS, 2 * DEC_ACT_W)
    reg("dec_p1_w", 2 * N_OBJECTS, 2 * DEC_P1_W)
    return layout, off


SLAB, SLAB_ROWS = _make_layout()               # SLAB_ROWS = 568  -> ~291 KB VMEM


# ----------------------------- BlockSpec helpers -----------------------------
def _vmem():
    return pl.BlockSpec(memory_space=pltpu.MemorySpace.VMEM)


def _smem():
    return pl.BlockSpec(memory_space=pltpu.MemorySpace.SMEM)


# ----------------------------- fused forward kernel ---------------------------
def fused_forward_kernel(alpha_ref, feat_ref, adj_ref, embin_ref, hc0_ref,
                         gnoise_ref, slab_ref, out_ref):
    alpha = alpha_ref[0]
    A, O, S, H = N_ACTIONS, N_OBJECTS, N_STATES, N_HIDDEN

    def W(name):
        r0, nr, nc = SLAB[name]
        return slab_ref[r0:r0 + nr, :nc]

    def prelu(x):
        return jnp.where(x > 0, x, alpha * x)

    def softmax_row(y):                        # softmax over the feature axis of a (1, K) row
        y = y - jnp.max(y, axis=-1, keepdims=True)
        e = jnp.exp(y)
        return e / jnp.sum(e, axis=-1, keepdims=True)

    def gumbel_softmax(p, g):
        # TODO(synk): matches the reference helper's call gumbel_softmax(probabilities, tau)
        return softmax_row((p + g) * (1.0 / GUMBEL_TAU))

    # --- gated hetero-RGCN layer (dense-adjacency form), all etypes in two matmuls
    # TODO(synk): exact GatedHeteroRGCNLayer definition not provided; this is a
    # per-source sigmoid-gated linear message summed over etypes via dense adjacency.
    h = feat_ref[...]                                                       # (N, F)
    msg = jnp.dot(h, W("gcn_w"), preferred_element_type=jnp.float32) + W("gcn_b")      # (N, E*H)
    gate = jax.nn.sigmoid(
        jnp.dot(h, W("gcn_gw"), preferred_element_type=jnp.float32) + W("gcn_gb"))     # (N, E)
    g_stack = jnp.concatenate(
        [msg[:, e * H:(e + 1) * H] * gate[:, e:e + 1] for e in range(N_ETYPES)],
        axis=0)                                                             # (E*N, H)
    h_nodes = prelu(jnp.dot(adj_ref[...], g_stack,
                            preferred_element_type=jnp.float32))            # (N, H)

    # --- goal + goal-object embeddings, one block-diagonal matmul
    emb = prelu(jnp.dot(embin_ref[...], W("embed_w"),
                        preferred_element_type=jnp.float32) + W("embed_b"))  # (8, H)
    goal_embed = emb[0:1]                                                    # (1, H)
    gobj = emb[1:1 + N_GOAL_OBJ]                                             # (G, H)

    # --- graph attention pooling: Softmax(dim=1) over an (N,1) score is identically
    #     1.0, so attn^T @ h is exactly the column sum of h (reference-equivalent).
    h_embed = jnp.sum(h_nodes, axis=0, keepdims=True)                        # (1, H)
    h_embed = prelu(jnp.dot(h_embed, W("gemb_w"),
                            preferred_element_type=jnp.float32) + W("gemb_b"))

    # --- goal-object attention over the goal-object axis (no width-1 matmul)
    goattn_w = W("goattn_w")                                                 # (2, H)
    const = jnp.sum(h_embed * goattn_w[0:1], axis=1, keepdims=True) + W("goattn_b")
    z = jnp.sum(gobj * goattn_w[1:2], axis=1, keepdims=True) + const         # (G, 1)
    z = z - jnp.max(z, axis=0, keepdims=True)
    ez = jnp.exp(z)
    attn = ez / jnp.sum(ez, axis=0, keepdims=True)                           # softmax(dim=0)
    gobj_pooled = jnp.sum(attn * gobj, axis=0, keepdims=True)                # (1, H)

    # --- single-step LSTM (PyTorch gate order i, f, g, o); fused [x;h] @ [Wih;Whh]
    h0 = hc0_ref[0:1]
    c0 = hc0_ref[1:2]
    xh = jnp.concatenate([h_embed, h0], axis=1)                              # (1, 2H)
    gates = jnp.dot(xh, W("lstm_w"), preferred_element_type=jnp.float32) + W("lstm_b")
    i_g = jax.nn.sigmoid(gates[:, 0 * H:1 * H])
    f_g = jax.nn.sigmoid(gates[:, 1 * H:2 * H])
    g_g = jnp.tanh(gates[:, 2 * H:3 * H])
    o_g = jax.nn.sigmoid(gates[:, 3 * H:4 * H])
    c_new = f_g * c0 + i_g * g_g
    h_hist = o_g * jnp.tanh(c_new)                                           # (1, H)

    # --- fc over cat([h_embed, h_hist, gobj_pooled, goal_embed]) as ONE matmul
    xcat = jnp.concatenate([h_embed, h_hist, gobj_pooled, goal_embed], axis=1)  # (1, 4H)
    final = prelu(jnp.dot(xcat, W("fc_w"),
                          preferred_element_type=jnp.float32) + W("fc_b"))      # (1, H)

    # --- decode heads, 3 fused MXU pushes total (both branches together)
    g = gnoise_ref[...]                                                      # (4, 128) gumbel noise
    dec_f = jnp.dot(final, W("dec_final_w"),
                    preferred_element_type=jnp.float32) + W("dec_final_b")   # (1, 2*34)
    off = DEC_W

    act_f = softmax_row(dec_f[:, 0:A])
    act_i = softmax_row(dec_f[:, off:off + A])
    oh_act_f = gumbel_softmax(act_f, g[0:1, :A])
    oh_act_i = gumbel_softmax(act_i, g[1:2, :A])

    dec_a = jnp.dot(jnp.concatenate([oh_act_f, oh_act_i], axis=1), W("dec_act_w"),
                    preferred_element_type=jnp.float32)                      # (1, 2*25)
    ca = DEC_ACT_W
    p1_f = softmax_row(dec_f[:, A:A + O] + dec_a[:, 0:O])
    p1_i = softmax_row(dec_f[:, off + A:off + A + O] + dec_a[:, ca:ca + O])
    oh_p1_f = gumbel_softmax(p1_f, g[2:3, :O])
    oh_p1_i = gumbel_softmax(p1_i, g[3:4, :O])

    dec_p = jnp.dot(jnp.concatenate([oh_p1_f, oh_p1_i], axis=1), W("dec_p1_w"),
                    preferred_element_type=jnp.float32)                      # (1, 2*15)
    cp = DEC_P1_W
    p2_f = softmax_row(dec_f[:, A + O:A + 2 * O] + dec_a[:, O:2 * O] + dec_p[:, 0:O])
    st_f = softmax_row(dec_f[:, A + 2 * O:A + 2 * O + S] + dec_a[:, 2 * O:2 * O + S]
                       + dec_p[:, O:O + S])
    p2_i = softmax_row(dec_f[:, off + A + O:off + A + 2 * O] + dec_a[:, ca + O:ca + 2 * O]
                       + dec_p[:, cp:cp + O])
    st_i = softmax_row(dec_f[:, off + A + 2 * O:off + A + 2 * O + S]
                       + dec_a[:, ca + 2 * O:ca + 2 * O + S] + dec_p[:, cp + O:cp + O + S])

    # --- single lane-dense output slab; direct row stores, no pad/concat tower
    out_ref[...] = jnp.zeros((16, LANES), jnp.float32)
    out_ref[0:1, 0:A] = act_f
    out_ref[1:2, 0:O] = p1_f
    out_ref[2:3, 0:O] = p2_f
    out_ref[3:4, 0:S] = st_f
    out_ref[4:5, 0:A] = act_i
    out_ref[5:6, 0:O] = p1_i
    out_ref[6:7, 0:O] = p2_i
    out_ref[7:8, 0:S] = st_i
    out_ref[8:9, 0:H] = h_hist
    out_ref[9:10, 0:H] = c_new


# ----------------------------- parameter init ---------------------------------
def _init_linear(key, fan_in, fan_out):
    k1, k2 = jax.random.split(key)
    bound = 1.0 / np.sqrt(fan_in)
    w = jax.random.uniform(k1, (fan_in, fan_out), jnp.float32, -bound, bound)
    b = jax.random.uniform(k2, (1, fan_out), jnp.float32, -bound, bound)
    return w, b


def init_params(key):
    keys = jax.random.split(key, 32)
    p = {}
    p["prelu_alpha"] = jnp.array([0.25], jnp.float32)  # single shared PReLU parameter

    # GatedHeteroRGCNLayer: per-etype message weights + gate weights
    gw_list, gb_list, ggw_list, ggb_list = [], [], [], []
    for e in range(N_ETYPES):
        w, b = _init_linear(keys[e], IN_FEATS, N_HIDDEN)
        gw, gb = _init_linear(keys[4 + e], IN_FEATS, 1)
        gw_list.append(w); gb_list.append(b)
        ggw_list.append(gw); ggb_list.append(gb)
    p["gcn_w"] = jnp.stack(gw_list)                     # (E, F, H)
    p["gcn_b"] = jnp.stack(gb_list)                     # (E, 1, H)
    p["gcn_gw"] = jnp.stack(ggw_list)                   # (E, F, 1)
    p["gcn_gb"] = jnp.stack(ggb_list)                   # (E, 1, 1)

    p["sbert_w"], p["sbert_b"] = _init_linear(keys[8], SBERT_VECTOR_SIZE, N_HIDDEN)
    p["cnet_w"], p["cnet_b"] = _init_linear(keys[9], PRETRAINED_VECTOR_SIZE, N_HIDDEN)
    # graph_attn params exist for parity but never affect the output: Softmax(dim=1)
    # over a width-1 score is identically 1, so the pooled value is the column sum.
    p["gattn_w"], p["gattn_b"] = _init_linear(keys[10], 2 * N_HIDDEN, 1)
    p["gemb_w"], p["gemb_b"] = _init_linear(keys[11], N_HIDDEN, N_HIDDEN)
    p["goattn_w"], p["goattn_b"] = _init_linear(keys[12], 2 * N_HIDDEN, 1)
    p["fc_w"], p["fc_b"] = _init_linear(keys[13], 4 * N_HIDDEN, N_HIDDEN)

    # LSTM (input H, hidden H), weights stored transposed: (H, 4H)
    p["lstm_wih"], p["lstm_bih"] = _init_linear(keys[14], N_HIDDEN, 4 * N_HIDDEN)
    p["lstm_whh"], p["lstm_bhh"] = _init_linear(keys[15], N_HIDDEN, 4 * N_HIDDEN)

    # decode heads: weight rows ordered [final(H), action(A), pred1(O)]
    for prefix, koff in (("", 16), ("inv_", 20)):
        p[prefix + "action_w"], p[prefix + "action_b"] = _init_linear(keys[koff + 0], N_HIDDEN, N_ACTIONS)
        p[prefix + "obj1_w"], p[prefix + "obj1_b"] = _init_linear(
            keys[koff + 1], N_HIDDEN + N_ACTIONS, N_OBJECTS)
        p[prefix + "obj2_w"], p[prefix + "obj2_b"] = _init_linear(
            keys[koff + 2], N_HIDDEN + N_ACTIONS + N_OBJECTS, N_OBJECTS)
        p[prefix + "state_w"], p[prefix + "state_b"] = _init_linear(
            keys[koff + 3], N_HIDDEN + N_ACTIONS + N_OBJECTS, N_STATES)
    return p


def pack_params(p):
    """One-time repack of per-module params into ONE lane-padded (SLAB_ROWS, 128) slab."""
    E, F, H = N_ETYPES, IN_FEATS, N_HIDDEN
    A, O, S = N_ACTIONS, N_OBJECTS, N_STATES
    slab = np.zeros((SLAB_ROWS, LANES), np.float32)

    def put(name, value):
        r0, nr, nc = SLAB[name]
        slab[r0:r0 + nr, :nc] = np.asarray(value, np.float32).reshape(nr, nc)

    put("gcn_w", np.transpose(np.asarray(p["gcn_w"]), (1, 0, 2)).reshape(F, E * H))
    put("gcn_b", np.transpose(np.asarray(p["gcn_b"]), (1, 0, 2)).reshape(1, E * H))
    put("gcn_gw", np.transpose(np.asarray(p["gcn_gw"])[..., 0], (1, 0)))
    put("gcn_gb", np.asarray(p["gcn_gb"]).reshape(1, E))

    embed_w = np.zeros((LANES, H), np.float32)
    embed_w[:SBERT_VECTOR_SIZE] = np.asarray(p["sbert_w"])
    embed_w[SBERT_VECTOR_SIZE:SBERT_VECTOR_SIZE + PRETRAINED_VECTOR_SIZE] = np.asarray(p["cnet_w"])
    put("embed_w", embed_w)
    embed_b = np.zeros((8, H), np.float32)
    embed_b[0] = np.asarray(p["sbert_b"]).reshape(H)
    embed_b[1:1 + N_GOAL_OBJ] = np.asarray(p["cnet_b"]).reshape(1, H)
    put("embed_b", embed_b)

    put("gemb_w", p["gemb_w"]); put("gemb_b", p["gemb_b"])
    goattn = np.asarray(p["goattn_w"]).reshape(2 * H)
    put("goattn_w", np.stack([goattn[:H], goattn[H:]], axis=0))   # row0 -> h_embed, row1 -> gobj
    put("goattn_b", np.asarray(p["goattn_b"]).reshape(1, 1))

    put("lstm_w", np.concatenate([np.asarray(p["lstm_wih"]), np.asarray(p["lstm_whh"])], axis=0))
    put("lstm_b", np.asarray(p["lstm_bih"]) + np.asarray(p["lstm_bhh"]))
    put("fc_w", p["fc_w"]); put("fc_b", p["fc_b"])

    dec_final_w = np.zeros((H, 2 * DEC_W), np.float32)
    dec_final_b = np.zeros((1, 2 * DEC_W), np.float32)
    dec_act_w = np.zeros((2 * A, 2 * DEC_ACT_W), np.float32)     # block-diag per branch
    dec_p1_w = np.zeros((2 * O, 2 * DEC_P1_W), np.float32)       # block-diag per branch
    for b, pre in enumerate(("", "inv_")):
        cf, ca, cp = b * DEC_W, b * DEC_ACT_W, b * DEC_P1_W
        aw, ab = np.asarray(p[pre + "action_w"]), np.asarray(p[pre + "action_b"])
        o1, o1b = np.asarray(p[pre + "obj1_w"]), np.asarray(p[pre + "obj1_b"])
        o2, o2b = np.asarray(p[pre + "obj2_w"]), np.asarray(p[pre + "obj2_b"])
        st, stb = np.asarray(p[pre + "state_w"]), np.asarray(p[pre + "state_b"])
        # final-dependent parts (+ all biases, added once)
        dec_final_w[:, cf:cf + A] = aw
        dec_final_w[:, cf + A:cf + A + O] = o1[:H]
        dec_final_w[:, cf + A + O:cf + A + 2 * O] = o2[:H]
        dec_final_w[:, cf + A + 2 * O:cf + A + 2 * O + S] = st[:H]
        dec_final_b[0, cf:cf + A] = ab.reshape(A)
        dec_final_b[0, cf + A:cf + A + O] = o1b.reshape(O)
        dec_final_b[0, cf + A + O:cf + A + 2 * O] = o2b.reshape(O)
        dec_final_b[0, cf + A + 2 * O:cf + A + 2 * O + S] = stb.reshape(S)
        # one-hot-action-dependent parts
        dec_act_w[b * A:(b + 1) * A, ca:ca + O] = o1[H:H + A]
        dec_act_w[b * A:(b + 1) * A, ca + O:ca + 2 * O] = o2[H:H + A]
        dec_act_w[b * A:(b + 1) * A, ca + 2 * O:ca + 2 * O + S] = st[H:H + A]
        # one-hot-pred1-dependent parts
        dec_p1_w[b * O:(b + 1) * O, cp:cp + O] = o2[H + A:]
        dec_p1_w[b * O:(b + 1) * O, cp + O:cp + O + S] = st[H + A:]
    put("dec_final_w", dec_final_w)
    put("dec_final_b", dec_final_b)
    put("dec_act_w", dec_act_w)
    put("dec_p1_w", dec_p1_w)

    return jnp.asarray(slab)


# ----------------------------- forward pass ------------------------------------
@jax.jit
def ggcn_forward(slab, alpha, node_feats, adj, goal_vec, goal_objects_vec, lstm_hidden, gumbel_key):
    h0, c0 = lstm_hidden

    # fused per-etype adjacency: one (N, E*N) tile
    adj_cat = jnp.transpose(adj, (1, 0, 2)).reshape(N_NODES, N_ETYPES * N_NODES)
    # block-diagonal LHS for the fused goal/goal-object embedding matmul
    embed_in = jnp.zeros((8, LANES), jnp.float32)
    embed_in = embed_in.at[0, :SBERT_VECTOR_SIZE].set(goal_vec)
    embed_in = embed_in.at[1:1 + N_GOAL_OBJ,
                           SBERT_VECTOR_SIZE:SBERT_VECTOR_SIZE + PRETRAINED_VECTOR_SIZE].set(goal_objects_vec)
    hc0 = jnp.concatenate([h0.reshape(1, N_HIDDEN), c0.reshape(1, N_HIDDEN)], axis=0)
    # Gumbel noise generated host/XLA-side (TPU PRNG primitives do not lower in interpret mode)
    gnoise = jax.random.gumbel(gumbel_key, (4, LANES), jnp.float32)

    out = pl.pallas_call(
        fused_forward_kernel,
        out_shape=jax.ShapeDtypeStruct((16, LANES), jnp.float32),
        in_specs=[_smem()] + [_vmem()] * 6,
        out_specs=_vmem(),
    )(alpha, node_feats, adj_cat, embed_in, hc0, gnoise, slab)

    outs = (out[0, :N_ACTIONS], out[1, :N_OBJECTS], out[2, :N_OBJECTS], out[3, :N_STATES],
            out[4, :N_ACTIONS], out[5, :N_OBJECTS], out[6, :N_OBJECTS], out[7, :N_STATES])
    new_hidden = (out[8:9, :N_HIDDEN].reshape(1, 1, N_HIDDEN),
                  out[9:10, :N_HIDDEN].reshape(1, 1, N_HIDDEN))
    return outs, new_hidden


# ----------------------------- main --------------------------------------------
if __name__ == "__main__":
    root = jax.random.PRNGKey(0)
    k_param, k_feat, k_adj, k_goal, k_gobj, k_lstm, k_gumbel = jax.random.split(root, 7)

    params = init_params(k_param)
    slab = pack_params(params)

    node_feats = jax.random.normal(k_feat, (N_NODES, IN_FEATS), jnp.float32)
    # dense per-etype adjacency (0/1) standing in for the DGL heterograph
    adj = (jax.random.uniform(k_adj, (N_ETYPES, N_NODES, N_NODES)) < 0.3).astype(jnp.float32)
    goal_vec = jax.random.normal(k_goal, (SBERT_VECTOR_SIZE,), jnp.float32)
    goal_objects_vec = jax.random.normal(k_gobj, (N_GOAL_OBJ, PRETRAINED_VECTOR_SIZE), jnp.float32)
    kh, kc = jax.random.split(k_lstm)
    lstm_hidden = (jax.random.normal(kh, (1, 1, N_HIDDEN), jnp.float32),
                   jax.random.normal(kc, (1, 1, N_HIDDEN), jnp.float32))

    outputs, new_hidden = ggcn_forward(slab, params["prelu_alpha"], node_feats, adj,
                                       goal_vec, goal_objects_vec, lstm_hidden, k_gumbel)
    outputs = jax.block_until_ready(outputs)
    new_hidden = jax.block_until_ready(new_hidden)

    expected_shapes = [(N_ACTIONS,), (N_OBJECTS,), (N_OBJECTS,), (N_STATES,),
                       (N_ACTIONS,), (N_OBJECTS,), (N_OBJECTS,), (N_STATES,)]
    assert all(o.shape == s for o, s in zip(outputs, expected_shapes))
    assert all(bool(jnp.all(jnp.isfinite(o))) for o in outputs)
    # each head is a softmax -> sums to 1
    assert all(abs(float(jnp.sum(o)) - 1.0) < 1e-3 for o in outputs)
    assert new_hidden[0].shape == (1, 1, N_HIDDEN) and new_hidden[1].shape == (1, 1, N_HIDDEN)
    print("KERNEL_OK")
</pallas_src>

<mosaic_0001>
module attributes {stable_mosaic.version = 11 : i64} {
  func.func @fused_forward_kernel(%arg0: memref<1xf32, #tpu.memory_space<smem>>, %arg1: memref<12x32xf32, #tpu.memory_space<vmem>>, %arg2: memref<12x36xf32, #tpu.memory_space<vmem>>, %arg3: memref<8x128xf32, #tpu.memory_space<vmem>>, %arg4: memref<2x32xf32, #tpu.memory_space<vmem>>, %arg5: memref<4x128xf32, #tpu.memory_space<vmem>>, %arg6: memref<568x128xf32, #tpu.memory_space<vmem>>, %arg7: memref<16x128xf32, #tpu.memory_space<vmem>>) attributes {dimension_semantics = [], scalar_prefetch = 0 : i64, scratch_operands = 0 : i64, tpu.core_type = #tpu.core_type<tc>} {
    %c0 = arith.constant 0 : index
    %0 = memref.load %arg0[%c0] : memref<1xf32, #tpu.memory_space<smem>>
    %c0_0 = arith.constant 0 : index
    %c0_1 = arith.constant 0 : index
    %1 = vector.load %arg1[%c0_0, %c0_1] : memref<12x32xf32, #tpu.memory_space<vmem>>, vector<12x32xf32>
    %c0_2 = arith.constant 0 : index
    %c0_3 = arith.constant 0 : index
    %2 = vector.load %arg6[%c0_2, %c0_3] : memref<568x128xf32, #tpu.memory_space<vmem>>, vector<32x96xf32>
    %cst = arith.constant dense<0.000000e+00> : vector<12x96xf32>
    %3 = tpu.matmul %1, %2, %cst {dimension_numbers = #tpu.dot_dimension_numbers<[1], [0], [0], [1], [0, 0, 1, 1], [], []>} : vector<12x32xf32>, vector<32x96xf32>, vector<12x96xf32> -> vector<12x96xf32>
    %c32 = arith.constant 32 : index
    %c0_4 = arith.constant 0 : index
    %4 = vector.load %arg6[%c32, %c0_4] : memref<568x128xf32, #tpu.memory_space<vmem>>, vector<1x96xf32>
    %5 = vector.broadcast %4 : vector<1x96xf32> to vector<12x96xf32>
    %6 = arith.addf %3, %5 : vector<12x96xf32>
    %c40 = arith.constant 40 : index
    %c0_5 = arith.constant 0 : index
    %7 = vector.load %arg6[%c40, %c0_5] : memref<568x128xf32, #tpu.memory_space<vmem>>, vector<32x3xf32>
    %cst_6 = arith.constant dense<0.000000e+00> : vector<12x3xf32>
    %8 = tpu.matmul %1, %7, %cst_6 {dimension_numbers = #tpu.dot_dimension_numbers<[1], [0], [0], [1], [0, 0, 1, 1], [], []>} : vector<12x32xf32>, vector<32x3xf32>, vector<12x3xf32> -> vector<12x3xf32>
    %c72 = arith.constant 72 : index
    %c0_7 = arith.constant 0 : index
    %9 = vector.load %arg6[%c72, %c0_7] : memref<568x128xf32, #tpu.memory_space<vmem>>, vector<1x3xf32>
    %10 = vector.broadcast %9 : vector<1x3xf32> to vector<12x3xf32>
    %11 = arith.addf %8, %10 : vector<12x3xf32>
    %12 = arith.negf %11 : vector<12x3xf32>
    %13 = math.exp %12 : vector<12x3xf32>
    %cst_8 = arith.constant 1.000000e+00 : f32
    %14 = vector.broadcast %cst_8 : f32 to vector<12x3xf32>
    %15 = arith.addf %14, %13 : vector<12x3xf32>
    %16 = arith.divf %14, %15 : vector<12x3xf32>
    %17 = vector.extract_strided_slice %6 {offsets = [0, 0], sizes = [12, 32], strides = [1, 1]} : vector<12x96xf32> to vector<12x32xf32>
    %18 = vector.extract_strided_slice %16 {offsets = [0, 0], sizes = [12, 1], strides = [1, 1]} : vector<12x3xf32> to vector<12x1xf32>
    %19 = vector.broadcast %18 : vector<12x1xf32> to vector<12x32xf32>
    %20 = arith.mulf %17, %19 : vector<12x32xf32>
    %21 = vector.extract_strided_slice %6 {offsets = [0, 32], sizes = [12, 32], strides = [1, 1]} : vector<12x96xf32> to vector<12x32xf32>
    %22 = vector.extract_strided_slice %16 {offsets = [0, 1], sizes = [12, 1], strides = [1, 1]} : vector<12x3xf32> to vector<12x1xf32>
    %23 = vector.broadcast %22 : vector<12x1xf32> to vector<12x32xf32>
    %24 = arith.mulf %21, %23 : vector<12x32xf32>
    %25 = vector.extract_strided_slice %6 {offsets = [0, 64], sizes = [12, 32], strides = [1, 1]} : vector<12x96xf32> to vector<12x32xf32>
    %26 = vector.extract_strided_slice %16 {offsets = [0, 2], sizes = [12, 1], strides = [1, 1]} : vector<12x3xf32> to vector<12x1xf32>
    %27 = vector.broadcast %26 : vector<12x1xf32> to vector<12x32xf32>
    %28 = arith.mulf %25, %27 : vector<12x32xf32>
    %29 = tpu.concatenate %20, %24, %28 in 0 : vector<12x32xf32>, vector<12x32xf32>, vector<12x32xf32> -> vector<36x32xf32>
    %c0_9 = arith.constant 0 : index
    %c0_10 = arith.constant 0 : index
    %30 = vector.load %arg2[%c0_9, %c0_10] : memref<12x36xf32, #tpu.memory_space<vmem>>, vector<12x36xf32>
    %cst_11 = arith.constant dense<0.000000e+00> : vector<12x32xf32>
    %31 = tpu.matmul %30, %29, %cst_11 {dimension_numbers = #tpu.dot_dimension_numbers<[1], [0], [0], [1], [0, 0, 1, 1], [], []>} : vector<12x36xf32>, vector<36x32xf32>, vector<12x32xf32> -> vector<12x32xf32>
    %cst_12 = arith.constant 0.000000e+00 : f32
    %32 = vector.broadcast %cst_12 : f32 to vector<12x32xf32>
    %33 = arith.cmpf ogt, %31, %32 : vector<12x32xf32>
    %34 = vector.broadcast %0 : f32 to vector<12x32xf32>
    %35 = arith.mulf %34, %31 : vector<12x32xf32>
    %36 = arith.select %33, %31, %35 : vector<12x32xi1>, vector<12x32xf32>
    %c0_13 = arith.constant 0 : index
    %c0_14 = arith.constant 0 : index
    %37 = vector.load %arg3[%c0_13, %c0_14] : memref<8x128xf32, #tpu.memory_space<vmem>>, vector<8x128xf32>
    %c80 = arith.constant 80 : index
    %c0_15 = arith.constant 0 : index
    %38 = vector.load %arg6[%c80, %c0_15] : memref<568x128xf32, #tpu.memory_space<vmem>>, vector<128x32xf32>
    %cst_16 = arith.constant dense<0.000000e+00> : vector<8x32xf32>
    %39 = tpu.matmul %37, %38, %cst_16 {dimension_numbers = #tpu.dot_dimension_numbers<[1], [0], [0], [1], [0, 0, 1, 1], [], []>} : vector<8x128xf32>, vector<128x32xf32>, vector<8x32xf32> -> vector<8x32xf32>
    %c208 = arith.constant 208 : index
    %c0_17 = arith.constant 0 : index
    %40 = vector.load %arg6[%c208, %c0_17] : memref<568x128xf32, #tpu.memory_space<vmem>>, vector<8x32xf32>
    %41 = arith.addf %39, %40 : vector<8x32xf32>
    %cst_18 = arith.constant 0.000000e+00 : f32
    %42 = vector.broadcast %cst_18 : f32 to vector<8x32xf32>
    %43 = arith.cmpf ogt, %41, %42 : vector<8x32xf32>
    %44 = vector.broadcast %0 : f32 to vector<8x32xf32>
    %45 = arith.mulf %44, %41 : vector<8x32xf32>
    %46 = arith.select %43, %41, %45 : vector<8x32xi1>, vector<8x32xf32>
    %47 = vector.extract_strided_slice %46 {offsets = [0, 0], sizes = [1, 32], strides = [1, 1]} : vector<8x32xf32> to vector<1x32xf32>
    %48 = vector.extract_strided_slice %46 {offsets = [1, 0], sizes = [4, 32], strides = [1, 1]} : vector<8x32xf32> to vector<4x32xf32>
    %cst_19 = arith.constant dense<0.000000e+00> : vector<32xf32>
    %49 = vector.multi_reduction <add>, %36, %cst_19 [0] : vector<12x32xf32> to vector<32xf32>
    %50 = vector.shape_cast %49 : vector<32xf32> to vector<1x32xf32>
    %c216 = arith.constant 216 : index
    %c0_20 = arith.constant 0 : index
    %51 = vector.load %arg6[%c216, %c0_20] : memref<568x128xf32, #tpu.memory_space<vmem>>, vector<32x32xf32>
    %cst_21 = arith.constant dense<0.000000e+00> : vector<1x32xf32>
    %52 = tpu.matmul %50, %51, %cst_21 {dimension_numbers = #tpu.dot_dimension_numbers<[1], [0], [0], [1], [0, 0, 1, 1], [], []>} : vector<1x32xf32>, vector<32x32xf32>, vector<1x32xf32> -> vector<1x32xf32>
    %c248 = arith.constant 248 : index
    %c0_22 = arith.constant 0 : index
    %53 = vector.load %arg6[%c248, %c0_22] : memref<568x128xf32, #tpu.memory_space<vmem>>, vector<1x32xf32>
    %54 = arith.addf %52, %53 : vector<1x32xf32>
    %cst_23 = arith.constant 0.000000e+00 : f32
    %55 = vector.broadcast %cst_23 : f32 to vector<1x32xf32>
    %56 = arith.cmpf ogt, %54, %55 : vector<1x32xf32>
    %57 = vector.broadcast %0 : f32 to vector<1x32xf32>
    %58 = arith.mulf %57, %54 : vector<1x32xf32>
    %59 = arith.select %56, %54, %58 : vector<1x32xi1>, vector<1x32xf32>
    %c256 = arith.constant 256 : index
    %c0_24 = arith.constant 0 : index
    %60 = vector.load %arg6[%c256, %c0_24] : memref<568x128xf32, #tpu.memory_space<vmem>>, vector<2x32xf32>
    %61 = vector.extract_strided_slice %60 {offsets = [0, 0], sizes = [1, 32], strides = [1, 1]} : vector<2x32xf32> to vector<1x32xf32>
    %62 = arith.mulf %59, %61 : vector<1x32xf32>
    %cst_25 = arith.constant dense<0.000000e+00> : vector<1xf32>
    %63 = vector.multi_reduction <add>, %62, %cst_25 [1] : vector<1x32xf32> to vector<1xf32>
    %64 = vector.shape_cast %63 : vector<1xf32> to vector<1x1xf32>
    %c264 = arith.constant 264 : index
    %c0_26 = arith.constant 0 : index
    %65 = vector.load %arg6[%c264, %c0_26] : memref<568x128xf32, #tpu.memory_space<vmem>>, vector<1x1xf32>
    %66 = arith.addf %64, %65 : vector<1x1xf32>
    %67 = vector.extract_strided_slice %60 {offsets = [1, 0], sizes = [1, 32], strides = [1, 1]} : vector<2x32xf32> to vector<1x32xf32>
    %68 = vector.broadcast %67 : vector<1x32xf32> to vector<4x32xf32>
    %69 = arith.mulf %48, %68 : vector<4x32xf32>
    %cst_27 = arith.constant dense<0.000000e+00> : vector<4xf32>
    %70 = vector.multi_reduction <add>, %69, %cst_27 [1] : vector<4x32xf32> to vector<4xf32>
    %71 = vector.shape_cast %70 : vector<4xf32> to vector<4x1xf32>
    %72 = vector.broadcast %66 : vector<1x1xf32> to vector<4x1xf32>
    %73 = arith.addf %71, %72 : vector<4x1xf32>
    %cst_28 = arith.constant dense<0xFF800000> : vector<1xf32>
    %74 = vector.multi_reduction <maximumf>, %73, %cst_28 [0] : vector<4x1xf32> to vector<1xf32>
    %75 = vector.shape_cast %74 : vector<1xf32> to vector<1x1xf32>
    %76 = vector.broadcast %75 : vector<1x1xf32> to vector<4x1xf32>
    %77 = arith.subf %73, %76 : vector<4x1xf32>
    %78 = math.exp %77 : vector<4x1xf32>
    %cst_29 = arith.constant dense<0.000000e+00> : vector<1xf32>
    %79 = vector.multi_reduction <add>, %78, %cst_29 [0] : vector<4x1xf32> to vector<1xf32>
    %80 = vector.shape_cast %79 : vector<1xf32> to vector<1x1xf32>
    %81 = vector.broadcast %80 : vector<1x1xf32> to vector<4x1xf32>
    %82 = arith.divf %78, %81 : vector<4x1xf32>
    %83 = vector.broadcast %82 : vector<4x1xf32> to vector<4x32xf32>
    %84 = arith.mulf %83, %48 : vector<4x32xf32>
    %cst_30 = arith.constant dense<0.000000e+00> : vector<32xf32>
    %85 = vector.multi_reduction <add>, %84, %cst_30 [0] : vector<4x32xf32> to vector<32xf32>
    %86 = vector.shape_cast %85 : vector<32xf32> to vector<1x32xf32>
    %c0_31 = arith.constant 0 : index
    %c0_32 = arith.constant 0 : index
    %87 = vector.load %arg4[%c0_31, %c0_32] : memref<2x32xf32, #tpu.memory_space<vmem>>, vector<1x32xf32>
    %c1 = arith.constant 1 : index
    %c0_33 = arith.constant 0 : index
    %88 = vector.load %arg4[%c1, %c0_33] : memref<2x32xf32, #tpu.memory_space<vmem>>, vector<1x32xf32>
    %89 = tpu.concatenate %59, %87 in 1 : vector<1x32xf32>, vector<1x32xf32> -> vector<1x64xf32>
    %c272 = arith.constant 272 : index
    %c0_34 = arith.constant 0 : index
    %90 = vector.load %arg6[%c272, %c0_34] : memref<568x128xf32, #tpu.memory_space<vmem>>, vector<64x128xf32>
    %cst_35 = arith.constant dense<0.000000e+00> : vector<1x128xf32>
    %91 = tpu.matmul %89, %90, %cst_35 {dimension_numbers = #tpu.dot_dimension_numbers<[1], [0], [0], [1], [0, 0, 1, 1], [], []>} : vector<1x64xf32>, vector<64x128xf32>, vector<1x128xf32> -> vector<1x128xf32>
    %c336 = arith.constant 336 : index
    %c0_36 = arith.constant 0 : index
    %92 = vector.load %arg6[%c336, %c0_36] : memref<568x128xf32, #tpu.memory_space<vmem>>, vector<1x128xf32>
    %93 = arith.addf %91, %92 : vector<1x128xf32>
    %94 = vector.extract_strided_slice %93 {offsets = [0, 0], sizes = [1, 32], strides = [1, 1]} : vector<1x128xf32> to vector<1x32xf32>
    %95 = arith.negf %94 : vector<1x32xf32>
    %96 = math.exp %95 : vector<1x32xf32>
    %cst_37 = arith.constant 1.000000e+00 : f32
    %97 = vector.broadcast %cst_37 : f32 to vector<1x32xf32>
    %98 = arith.addf %97, %96 : vector<1x32xf32>
    %99 = arith.divf %97, %98 : vector<1x32xf32>
    %100 = vector.extract_strided_slice %93 {offsets = [0, 32], sizes = [1, 32], strides = [1, 1]} : vector<1x128xf32> to vector<1x32xf32>
    %101 = arith.negf %100 : vector<1x32xf32>
    %102 = math.exp %101 : vector<1x32xf32>
    %cst_38 = arith.constant 1.000000e+00 : f32
    %103 = vector.broadcast %cst_38 : f32 to vector<1x32xf32>
    %104 = arith.addf %103, %102 : vector<1x32xf32>
    %105 = arith.divf %103, %104 : vector<1x32xf32>
    %106 = vector.extract_strided_slice %93 {offsets = [0, 64], sizes = [1, 32], strides = [1, 1]} : vector<1x128xf32> to vector<1x32xf32>
    %107 = math.tanh %106 : vector<1x32xf32>
    %108 = vector.extract_strided_slice %93 {offsets = [0, 96], sizes = [1, 32], strides = [1, 1]} : vector<1x128xf32> to vector<1x32xf32>
    %109 = arith.negf %108 : vector<1x32xf32>
    %110 = math.exp %109 : vector<1x32xf32>
    %cst_39 = arith.constant 1.000000e+00 : f32
    %111 = vector.broadcast %cst_39 : f32 to vector<1x32xf32>
    %112 = arith.addf %111, %110 : vector<1x32xf32>
    %113 = arith.divf %111, %112 : vector<1x32xf32>
    %114 = arith.mulf %105, %88 : vector<1x32xf32>
    %115 = arith.mulf %99, %107 : vector<1x32xf32>
    %116 = arith.addf %114, %115 : vector<1x32xf32>
    %117 = math.tanh %116 : vector<1x32xf32>
    %118 = arith.mulf %113, %117 : vector<1x32xf32>
    %119 = tpu.concatenate %59, %118, %86, %47 in 1 : vector<1x32xf32>, vector<1x32xf32>, vector<1x32xf32>, vector<1x32xf32> -> vector<1x128xf32>
    %c344 = arith.constant 344 : index
    %c0_40 = arith.constant 0 : index
    %120 = vector.load %arg6[%c344, %c0_40] : memref<568x128xf32, #tpu.memory_space<vmem>>, vector<128x32xf32>
    %cst_41 = arith.constant dense<0.000000e+00> : vector<1x32xf32>
    %121 = tpu.matmul %119, %120, %cst_41 {dimension_numbers = #tpu.dot_dimension_numbers<[1], [0], [0], [1], [0, 0, 1, 1], [], []>} : vector<1x128xf32>, vector<128x32xf32>, vector<1x32xf32> -> vector<1x32xf32>
    %c472 = arith.constant 472 : index
    %c0_42 = arith.constant 0 : index
    %122 = vector.load %arg6[%c472, %c0_42] : memref<568x128xf32, #tpu.memory_space<vmem>>, vector<1x32xf32>
    %123 = arith.addf %121, %122 : vector<1x32xf32>
    %cst_43 = arith.constant 0.000000e+00 : f32
    %124 = vector.broadcast %cst_43 : f32 to vector<1x32xf32>
    %125 = arith.cmpf ogt, %123, %124 : vector<1x32xf32>
    %126 = vector.broadcast %0 : f32 to vector<1x32xf32>
    %127 = arith.mulf %126, %123 : vector<1x32xf32>
    %128 = arith.select %125, %123, %127 : vector<1x32xi1>, vector<1x32xf32>
    %c0_44 = arith.constant 0 : index
    %c0_45 = arith.constant 0 : index
    %129 = vector.load %arg5[%c0_44, %c0_45] : memref<4x128xf32, #tpu.memory_space<vmem>>, vector<4x128xf32>
    %c480 = arith.constant 480 : index
    %c0_46 = arith.constant 0 : index
    %130 = vector.load %arg6[%c480, %c0_46] : memref<568x128xf32, #tpu.memory_space<vmem>>, vector<32x68xf32>
    %cst_47 = arith.constant dense<0.000000e+00> : vector<1x68xf32>
    %131 = tpu.matmul %128, %130, %cst_47 {dimension_numbers = #tpu.dot_dimension_numbers<[1], [0], [0], [1], [0, 0, 1, 1], [], []>} : vector<1x32xf32>, vector<32x68xf32>, vector<1x68xf32> -> vector<1x68xf32>
    %c512 = arith.constant 512 : index
    %c0_48 = arith.constant 0 : index
    %132 = vector.load %arg6[%c512, %c0_48] : memref<568x128xf32, #tpu.memory_space<vmem>>, vector<1x68xf32>
    %133 = arith.addf %131, %132 : vector<1x68xf32>
    %134 = vector.extract_strided_slice %133 {offsets = [0, 0], sizes = [1, 9], strides = [1, 1]} : vector<1x68xf32> to vector<1x9xf32>
    %cst_49 = arith.constant dense<0xFF800000> : vector<1xf32>
    %135 = vector.multi_reduction <maximumf>, %134, %cst_49 [1] : vector<1x9xf32> to vector<1xf32>
    %136 = vector.shape_cast %135 : vector<1xf32> to vector<1x1xf32>
    %137 = vector.broadcast %136 : vector<1x1xf32> to vector<1x9xf32>
    %138 = arith.subf %134, %137 : vector<1x9xf32>
    %139 = math.exp %138 : vector<1x9xf32>
    %cst_50 = arith.constant dense<0.000000e+00> : vector<1xf32>
    %140 = vector.multi_reduction <add>, %139, %cst_50 [1] : vector<1x9xf32> to vector<1xf32>
    %141 = vector.shape_cast %140 : vector<1xf32> to vector<1x1xf32>
    %142 = vector.broadcast %141 : vector<1x1xf32> to vector<1x9xf32>
    %143 = arith.divf %139, %142 : vector<1x9xf32>
    %144 = vector.extract_strided_slice %133 {offsets = [0, 34], sizes = [1, 9], strides = [1, 1]} : vector<1x68xf32> to vector<1x9xf32>
    %cst_51 = arith.constant dense<0xFF800000> : vector<1xf32>
    %145 = vector.multi_reduction <maximumf>, %144, %cst_51 [1] : vector<1x9xf32> to vector<1xf32>
    %146 = vector.shape_cast %145 : vector<1xf32> to vector<1x1xf32>
    %147 = vector.broadcast %146 : vector<1x1xf32> to vector<1x9xf32>
    %148 = arith.subf %144, %147 : vector<1x9xf32>
    %149 = math.exp %148 : vector<1x9xf32>
    %cst_52 = arith.constant dense<0.000000e+00> : vector<1xf32>
    %150 = vector.multi_reduction <add>, %149, %cst_52 [1] : vector<1x9xf32> to vector<1xf32>
    %151 = vector.shape_cast %150 : vector<1xf32> to vector<1x1xf32>
    %152 = vector.broadcast %151 : vector<1x1xf32> to vector<1x9xf32>
    %153 = arith.divf %149, %152 : vector<1x9xf32>
    %154 = vector.extract_strided_slice %129 {offsets = [0, 0], sizes = [1, 9], strides = [1, 1]} : vector<4x128xf32> to vector<1x9xf32>
    %155 = arith.addf %143, %154 : vector<1x9xf32>
    %cst_53 = arith.constant 1.000000e+02 : f32
    %156 = vector.broadcast %cst_53 : f32 to vector<1x9xf32>
    %157 = arith.mulf %155, %156 : vector<1x9xf32>
    %cst_54 = arith.constant dense<0xFF800000> : vector<1xf32>
    %158 = vector.multi_reduction <maximumf>, %157, %cst_54 [1] : vector<1x9xf32> to vector<1xf32>
    %159 = vector.shape_cast %158 : vector<1xf32> to vector<1x1xf32>
    %160 = vector.broadcast %159 : vector<1x1xf32> to vector<1x9xf32>
    %161 = arith.subf %157, %160 : vector<1x9xf32>
    %162 = math.exp %161 : vector<1x9xf32>
    %cst_55 = arith.constant dense<0.000000e+00> : vector<1xf32>
    %163 = vector.multi_reduction <add>, %162, %cst_55 [1] : vector<1x9xf32> to vector<1xf32>
    %164 = vector.shape_cast %163 : vector<1xf32> to vector<1x1xf32>
    %165 = vector.broadcast %164 : vector<1x1xf32> to vector<1x9xf32>
    %166 = arith.divf %162, %165 : vector<1x9xf32>
    %167 = vector.extract_strided_slice %129 {offsets = [1, 0], sizes = [1, 9], strides = [1, 1]} : vector<4x128xf32> to vector<1x9xf32>
    %168 = arith.addf %153, %167 : vector<1x9xf32>
    %cst_56 = arith.constant 1.000000e+02 : f32
    %169 = vector.broadcast %cst_56 : f32 to vector<1x9xf32>
    %170 = arith.mulf %168, %169 : vector<1x9xf32>
    %cst_57 = arith.constant dense<0xFF800000> : vector<1xf32>
    %171 = vector.multi_reduction <maximumf>, %170, %cst_57 [1] : vector<1x9xf32> to vector<1xf32>
    %172 = vector.shape_cast %171 : vector<1xf32> to vector<1x1xf32>
    %173 = vector.broadcast %172 : vector<1x1xf32> to vector<1x9xf32>
    %174 = arith.subf %170, %173 : vector<1x9xf32>
    %175 = math.exp %174 : vector<1x9xf32>
    %cst_58 = arith.constant dense<0.000000e+00> : vector<1xf32>
    %176 = vector.multi_reduction <add>, %175, %cst_58 [1] : vector<1x9xf32> to vector<1xf32>
    %177 = vector.shape_cast %176 : vector<1xf32> to vector<1x1xf32>
    %178 = vector.broadcast %177 : vector<1x1xf32> to vector<1x9xf32>
    %179 = arith.divf %175, %178 : vector<1x9xf32>
    %180 = tpu.concatenate %166, %179 in 1 : vector<1x9xf32>, vector<1x9xf32> -> vector<1x18xf32>
    %c520 = arith.constant 520 : index
    %c0_59 = arith.constant 0 : index
    %181 = vector.load %arg6[%c520, %c0_59] : memref<568x128xf32, #tpu.memory_space<vmem>>, vector<18x50xf32>
    %cst_60 = arith.constant dense<0.000000e+00> : vector<1x50xf32>
    %182 = tpu.matmul %180, %181, %cst_60 {dimension_numbers = #tpu.dot_dimension_numbers<[1], [0], [0], [1], [0, 0, 1, 1], [], []>} : vector<1x18xf32>, vector<18x50xf32>, vector<1x50xf32> -> vector<1x50xf32>
    %183 = vector.extract_strided_slice %133 {offsets = [0, 9], sizes = [1, 10], strides = [1, 1]} : vector<1x68xf32> to vector<1x10xf32>
    %184 = vector.extract_strided_slice %182 {offsets = [0, 0], sizes = [1, 10], strides = [1, 1]} : vector<1x50xf32> to vector<1x10xf32>
    %185 = arith.addf %183, %184 : vector<1x10xf32>
    %cst_61 = arith.constant dense<0xFF800000> : vector<1xf32>
    %186 = vector.multi_reduction <maximumf>, %185, %cst_61 [1] : vector<1x10xf32> to vector<1xf32>
    %187 = vector.shape_cast %186 : vector<1xf32> to vector<1x1xf32>
    %188 = vector.broadcast %187 : vector<1x1xf32> to vector<1x10xf32>
    %189 = arith.subf %185, %188 : vector<1x10xf32>
    %190 = math.exp %189 : vector<1x10xf32>
    %cst_62 = arith.constant dense<0.000000e+00> : vector<1xf32>
    %191 = vector.multi_reduction <add>, %190, %cst_62 [1] : vector<1x10xf32> to vector<1xf32>
    %192 = vector.shape_cast %191 : vector<1xf32> to vector<1x1xf32>
    %193 = vector.broadcast %192 : vector<1x1xf32> to vector<1x10xf32>
    %194 = arith.divf %190, %193 : vector<1x10xf32>
    %195 = vector.extract_strided_slice %133 {offsets = [0, 43], sizes = [1, 10], strides = [1, 1]} : vector<1x68xf32> to vector<1x10xf32>
    %196 = vector.extract_strided_slice %182 {offsets = [0, 25], sizes = [1, 10], strides = [1, 1]} : vector<1x50xf32> to vector<1x10xf32>
    %197 = arith.addf %195, %196 : vector<1x10xf32>
    %cst_63 = arith.constant dense<0xFF800000> : vector<1xf32>
    %198 = vector.multi_reduction <maximumf>, %197, %cst_63 [1] : vector<1x10xf32> to vector<1xf32>
    %199 = vector.shape_cast %198 : vector<1xf32> to vector<1x1xf32>
    %200 = vector.broadcast %199 : vector<1x1xf32> to vector<1x10xf32>
    %201 = arith.subf %197, %200 : vector<1x10xf32>
    %202 = math.exp %201 : vector<1x10xf32>
    %cst_64 = arith.constant dense<0.000000e+00> : vector<1xf32>
    %203 = vector.multi_reduction <add>, %202, %cst_64 [1] : vector<1x10xf32> to vector<1xf32>
    %204 = vector.shape_cast %203 : vector<1xf32> to vector<1x1xf32>
    %205 = vector.broadcast %204 : vector<1x1xf32> to vector<1x10xf32>
    %206 = arith.divf %202, %205 : vector<1x10xf32>
    %207 = vector.extract_strided_slice %129 {offsets = [2, 0], sizes = [1, 10], strides = [1, 1]} : vector<4x128xf32> to vector<1x10xf32>
    %208 = arith.addf %194, %207 : vector<1x10xf32>
    %cst_65 = arith.constant 1.000000e+02 : f32
    %209 = vector.broadcast %cst_65 : f32 to vector<1x10xf32>
    %210 = arith.mulf %208, %209 : vector<1x10xf32>
    %cst_66 = arith.constant dense<0xFF800000> : vector<1xf32>
    %211 = vector.multi_reduction <maximumf>, %210, %cst_66 [1] : vector<1x10xf32> to vector<1xf32>
    %212 = vector.shape_cast %211 : vector<1xf32> to vector<1x1xf32>
    %213 = vector.broadcast %212 : vector<1x1xf32> to vector<1x10xf32>
    %214 = arith.subf %210, %213 : vector<1x10xf32>
    %215 = math.exp %214 : vector<1x10xf32>
    %cst_67 = arith.constant dense<0.000000e+00> : vector<1xf32>
    %216 = vector.multi_reduction <add>, %215, %cst_67 [1] : vector<1x10xf32> to vector<1xf32>
    %217 = vector.shape_cast %216 : vector<1xf32> to vector<1x1xf32>
    %218 = vector.broadcast %217 : vector<1x1xf32> to vector<1x10xf32>
    %219 = arith.divf %215, %218 : vector<1x10xf32>
    %220 = vector.extract_strided_slice %129 {offsets = [3, 0], sizes = [1, 10], strides = [1, 1]} : vector<4x128xf32> to vector<1x10xf32>
    %221 = arith.addf %206, %220 : vector<1x10xf32>
    %cst_68 = arith.constant 1.000000e+02 : f32
    %222 = vector.broadcast %cst_68 : f32 to vector<1x10xf32>
    %223 = arith.mulf %221, %222 : vector<1x10xf32>
    %cst_69 = arith.constant dense<0xFF800000> : vector<1xf32>
    %224 = vector.multi_reduction <maximumf>, %223, %cst_69 [1] : vector<1x10xf32> to vector<1xf32>
    %225 = vector.shape_cast %224 : vector<1xf32> to vector<1x1xf32>
    %226 = vector.broadcast %225 : vector<1x1xf32> to vector<1x10xf32>
    %227 = arith.subf %223, %226 : vector<1x10xf32>
    %228 = math.exp %227 : vector<1x10xf32>
    %cst_70 = arith.constant dense<0.000000e+00> : vector<1xf32>
    %229 = vector.multi_reduction <add>, %228, %cst_70 [1] : vector<1x10xf32> to vector<1xf32>
    %230 = vector.shape_cast %229 : vector<1xf32> to vector<1x1xf32>
    %231 = vector.broadcast %230 : vector<1x1xf32> to vector<1x10xf32>
    %232 = arith.divf %228, %231 : vector<1x10xf32>
    %233 = tpu.concatenate %219, %232 in 1 : vector<1x10xf32>, vector<1x10xf32> -> vector<1x20xf32>
    %c544 = arith.constant 544 : index
    %c0_71 = arith.constant 0 : index
    %234 = vector.load %arg6[%c544, %c0_71] : memref<568x128xf32, #tpu.memory_space<vmem>>, vector<20x30xf32>
    %cst_72 = arith.constant dense<0.000000e+00> : vector<1x30xf32>
    %235 = tpu.matmul %233, %234, %cst_72 {dimension_numbers = #tpu.dot_dimension_numbers<[1], [0], [0], [1], [0, 0, 1, 1], [], []>} : vector<1x20xf32>, vector<20x30xf32>, vector<1x30xf32> -> vector<1x30xf32>
    %236 = vector.extract_strided_slice %133 {offsets = [0, 19], sizes = [1, 10], strides = [1, 1]} : vector<1x68xf32> to vector<1x10xf32>
    %237 = vector.extract_strided_slice %182 {offsets = [0, 10], sizes = [1, 10], strides = [1, 1]} : vector<1x50xf32> to vector<1x10xf32>
    %238 = arith.addf %236, %237 : vector<1x10xf32>
    %239 = vector.extract_strided_slice %235 {offsets = [0, 0], sizes = [1, 10], strides = [1, 1]} : vector<1x30xf32> to vector<1x10xf32>
    %240 = arith.addf %238, %239 : vector<1x10xf32>
    %cst_73 = arith.constant dense<0xFF800000> : vector<1xf32>
    %241 = vector.multi_reduction <maximumf>, %240, %cst_73 [1] : vector<1x10xf32> to vector<1xf32>
    %242 = vector.shape_cast %241 : vector<1xf32> to vector<1x1xf32>
    %243 = vector.broadcast %242 : vector<1x1xf32> to vector<1x10xf32>
    %244 = arith.subf %240, %243 : vector<1x10xf32>
    %245 = math.exp %244 : vector<1x10xf32>
    %cst_74 = arith.constant dense<0.000000e+00> : vector<1xf32>
    %246 = vector.multi_reduction <add>, %245, %cst_74 [1] : vector<1x10xf32> to vector<1xf32>
    %247 = vector.shape_cast %246 : vector<1xf32> to vector<1x1xf32>
    %248 = vector.broadcast %247 : vector<1x1xf32> to vector<1x10xf32>
    %249 = arith.divf %245, %248 : vector<1x10xf32>
    %250 = vector.extract_strided_slice %133 {offsets = [0, 29], sizes = [1, 5], strides = [1, 1]} : vector<1x68xf32> to vector<1x5xf32>
    %251 = vector.extract_strided_slice %182 {offsets = [0, 20], sizes = [1, 5], strides = [1, 1]} : vector<1x50xf32> to vector<1x5xf32>
    %252 = arith.addf %250, %251 : vector<1x5xf32>
    %253 = vector.extract_strided_slice %235 {offsets = [0, 10], sizes = [1, 5], strides = [1, 1]} : vector<1x30xf32> to vector<1x5xf32>
    %254 = arith.addf %252, %253 : vector<1x5xf32>
    %cst_75 = arith.constant dense<0xFF800000> : vector<1xf32>
    %255 = vector.multi_reduction <maximumf>, %254, %cst_75 [1] : vector<1x5xf32> to vector<1xf32>
    %256 = vector.shape_cast %255 : vector<1xf32> to vector<1x1xf32>
    %257 = vector.broadcast %256 : vector<1x1xf32> to vector<1x5xf32>
    %258 = arith.subf %254, %257 : vector<1x5xf32>
    %259 = math.exp %258 : vector<1x5xf32>
    %cst_76 = arith.constant dense<0.000000e+00> : vector<1xf32>
    %260 = vector.multi_reduction <add>, %259, %cst_76 [1] : vector<1x5xf32> to vector<1xf32>
    %261 = vector.shape_cast %260 : vector<1xf32> to vector<1x1xf32>
    %262 = vector.broadcast %261 : vector<1x1xf32> to vector<1x5xf32>
    %263 = arith.divf %259, %262 : vector<1x5xf32>
    %264 = vector.extract_strided_slice %133 {offsets = [0, 53], sizes = [1, 10], strides = [1, 1]} : vector<1x68xf32> to vector<1x10xf32>
    %265 = vector.extract_strided_slice %182 {offsets = [0, 35], sizes = [1, 10], strides = [1, 1]} : vector<1x50xf32> to vector<1x10xf32>
    %266 = arith.addf %264, %265 : vector<1x10xf32>
    %267 = vector.extract_strided_slice %235 {offsets = [0, 15], sizes = [1, 10], strides = [1, 1]} : vector<1x30xf32> to vector<1x10xf32>
    %268 = arith.addf %266, %267 : vector<1x10xf32>
    %cst_77 = arith.constant dense<0xFF800000> : vector<1xf32>
    %269 = vector.multi_reduction <maximumf>, %268, %cst_77 [1] : vector<1x10xf32> to vector<1xf32>
    %270 = vector.shape_cast %269 : vector<1xf32> to vector<1x1xf32>
    %271 = vector.broadcast %270 : vector<1x1xf32> to vector<1x10xf32>
    %272 = arith.subf %268, %271 : vector<1x10xf32>
    %273 = math.exp %272 : vector<1x10xf32>
    %cst_78 = arith.constant dense<0.000000e+00> : vector<1xf32>
    %274 = vector.multi_reduction <add>, %273, %cst_78 [1] : vector<1x10xf32> to vector<1xf32>
    %275 = vector.shape_cast %274 : vector<1xf32> to vector<1x1xf32>
    %276 = vector.broadcast %275 : vector<1x1xf32> to vector<1x10xf32>
    %277 = arith.divf %273, %276 : vector<1x10xf32>
    %278 = vector.extract_strided_slice %133 {offsets = [0, 63], sizes = [1, 5], strides = [1, 1]} : vector<1x68xf32> to vector<1x5xf32>
    %279 = vector.extract_strided_slice %182 {offsets = [0, 45], sizes = [1, 5], strides = [1, 1]} : vector<1x50xf32> to vector<1x5xf32>
    %280 = arith.addf %278, %279 : vector<1x5xf32>
    %281 = vector.extract_strided_slice %235 {offsets = [0, 25], sizes = [1, 5], strides = [1, 1]} : vector<1x30xf32> to vector<1x5xf32>
    %282 = arith.addf %280, %281 : vector<1x5xf32>
    %cst_79 = arith.constant dense<0xFF800000> : vector<1xf32>
    %283 = vector.multi_reduction <maximumf>, %282, %cst_79 [1] : vector<1x5xf32> to vector<1xf32>
    %284 = vector.shape_cast %283 : vector<1xf32> to vector<1x1xf32>
    %285 = vector.broadcast %284 : vector<1x1xf32> to vector<1x5xf32>
    %286 = arith.subf %282, %285 : vector<1x5xf32>
    %287 = math.exp %286 : vector<1x5xf32>
    %cst_80 = arith.constant dense<0.000000e+00> : vector<1xf32>
    %288 = vector.multi_reduction <add>, %287, %cst_80 [1] : vector<1x5xf32> to vector<1xf32>
    %289 = vector.shape_cast %288 : vector<1xf32> to vector<1x1xf32>
    %290 = vector.broadcast %289 : vector<1x1xf32> to vector<1x5xf32>
    %291 = arith.divf %287, %290 : vector<1x5xf32>
    %cst_81 = arith.constant 0.000000e+00 : f32
    %292 = vector.broadcast %cst_81 : f32 to vector<16x128xf32>
    %c0_82 = arith.constant 0 : index
    %c0_83 = arith.constant 0 : index
    %293 = vector.load %arg7[%c0_82, %c0_83] : memref<16x128xf32, #tpu.memory_space<vmem>>, vector<16x128xf32>
    tpu.vector_store %arg7[%c0_82, %c0_83], %292 {strides = array<i32>} : memref<16x128xf32, #tpu.memory_space<vmem>>, vector<16x128xf32>,
    %c0_84 = arith.constant 0 : index
    %c0_85 = arith.constant 0 : index
    %294 = vector.load %arg7[%c0_84, %c0_85] : memref<16x128xf32, #tpu.memory_space<vmem>>, vector<1x9xf32>
    tpu.vector_store %arg7[%c0_84, %c0_85], %143 {strides = array<i32>} : memref<16x128xf32, #tpu.memory_space<vmem>>, vector<1x9xf32>,
    %c1_86 = arith.constant 1 : index
    %c0_87 = arith.constant 0 : index
    %295 = vector.load %arg7[%c1_86, %c0_87] : memref<16x128xf32, #tpu.memory_space<vmem>>, vector<1x10xf32>
    tpu.vector_store %arg7[%c1_86, %c0_87], %194 {strides = array<i32>} : memref<16x128xf32, #tpu.memory_space<vmem>>, vector<1x10xf32>,
    %c2 = arith.constant 2 : index
    %c0_88 = arith.constant 0 : index
    %296 = vector.load %arg7[%c2, %c0_88] : memref<16x128xf32, #tpu.memory_space<vmem>>, vector<1x10xf32>
    tpu.vector_store %arg7[%c2, %c0_88], %249 {strides = array<i32>} : memref<16x128xf32, #tpu.memory_space<vmem>>, vector<1x10xf32>,
    %c3 = arith.constant 3 : index
    %c0_89 = arith.constant 0 : index
    %297 = vector.load %arg7[%c3, %c0_89] : memref<16x128xf32, #tpu.memory_space<vmem>>, vector<1x5xf32>
    tpu.vector_store %arg7[%c3, %c0_89], %263 {strides = array<i32>} : memref<16x128xf32, #tpu.memory_space<vmem>>, vector<1x5xf32>,
    %c4 = arith.constant 4 : index
    %c0_90 = arith.constant 0 : index
    %298 = vector.load %arg7[%c4, %c0_90] : memref<16x128xf32, #tpu.memory_space<vmem>>, vector<1x9xf32>
    tpu.vector_store %arg7[%c4, %c0_90], %153 {strides = array<i32>} : memref<16x128xf32, #tpu.memory_space<vmem>>, vector<1x9xf32>,
    %c5 = arith.constant 5 : index
    %c0_91 = arith.constant 0 : index
    %299 = vector.load %arg7[%c5, %c0_91] : memref<16x128xf32, #tpu.memory_space<vmem>>, vector<1x10xf32>
    tpu.vector_store %arg7[%c5, %c0_91], %206 {strides = array<i32>} : memref<16x128xf32, #tpu.memory_space<vmem>>, vector<1x10xf32>,
    %c6 = arith.constant 6 : index
    %c0_92 = arith.constant 0 : index
    %300 = vector.load %arg7[%c6, %c0_92] : memref<16x128xf32, #tpu.memory_space<vmem>>, vector<1x10xf32>
    tpu.vector_store %arg7[%c6, %c0_92], %277 {strides = array<i32>} : memref<16x128xf32, #tpu.memory_space<vmem>>, vector<1x10xf32>,
    %c7 = arith.constant 7 : index
    %c0_93 = arith.constant 0 : index
    %301 = vector.load %arg7[%c7, %c0_93] : memref<16x128xf32, #tpu.memory_space<vmem>>, vector<1x5xf32>
    tpu.vector_store %arg7[%c7, %c0_93], %291 {strides = array<i32>} : memref<16x128xf32, #tpu.memory_space<vmem>>, vector<1x5xf32>,
    %c8 = arith.constant 8 : index
    %c0_94 = arith.constant 0 : index
    %302 = vector.load %arg7[%c8, %c0_94] : memref<16x128xf32, #tpu.memory_space<vmem>>, vector<1x32xf32>
    tpu.vector_store %arg7[%c8, %c0_94], %118 {strides = array<i32>} : memref<16x128xf32, #tpu.memory_space<vmem>>, vector<1x32xf32>,
    %c9 = arith.constant 9 : index
    %c0_95 = arith.constant 0 : index
    %303 = vector.load %arg7[%c9, %c0_95] : memref<16x128xf32, #tpu.memory_space<vmem>>, vector<1x32xf32>
    tpu.vector_store %arg7[%c9, %c0_95], %116 {strides = array<i32>} : memref<16x128xf32, #tpu.memory_space<vmem>>, vector<1x32xf32>,
    return
  }
}

</mosaic_0001>

<llo_original>
// kernel: ggcn_forward.1
$region0: #{ggcn_forward.1}
  #allocation0 [shape = 'u32[]', space=smem, size = 0x4, offset = 0x4, fixed_abs, tag = 'smem constant byte address 0x4 - core index']
  #allocation1 [shape = 'u32[144,128]{1,0:T(1,128)}', space=vmem, size = 0x12000, scoped, tag = 'internal scratch']
  #allocation2 [shape = 'f32[1]{0:T(128)S(6)}', space=smem, size = 0x200, scoped, tag = 'scoped memory for ggcn_forward.1']
  %s0 = inlined_call_operand.<no memory space> [shape: f32[1], index: 0, kind: input, shape index: {}]
  %s1 = inlined_call_operand.vmem [shape: f32[12,32], index: 1, kind: input, shape index: {}]
  %s2 = inlined_call_operand.vmem [shape: f32[12,36], index: 2, kind: input, shape index: {}]
  %s3 = inlined_call_operand.vmem [shape: f32[8,128], index: 3, kind: input, shape index: {}]
  %s4 = inlined_call_operand.vmem [shape: f32[2,32], index: 4, kind: input, shape index: {}]
  %s5 = inlined_call_operand.vmem [shape: f32[4,128], index: 5, kind: input, shape index: {}]
  %s6 = inlined_call_operand.hbm [shape: f32[568,128], index: 6, kind: input, shape index: {}]
  %s7 = inlined_call_operand.vmem [shape: f32[16,128], index: 7, kind: output, shape index: {}]
  %s8 = sld [smem:[#allocation0]]
  $region42: #{ggcn_forward.1} parent=0
    _
  %s10 = ssub.s32 1, %s8
  %s11 = scalar_select 0, %s10, %s8
  %12 = sst [smem:[#allocation2]] %s0
  $region1: #{ggcn_forward.1} parent=0
    #allocation3 [shape = 'u8[290816]{0}', space=vmem, size = 0x47000, scoped, tag = 'input window, operand 6, single buffered']
    #allocation4 [shape = 's32[1]{0}', space=sflag, size = 0x4, scoped, tag = 'scoped memory for ggcn_forward.1']
    %13 = vsyncpa [#allocation4], 0
    // Predicated region
    $region2: #{ggcn_forward.1} parent=1 // pred_check
      _
    $region3: #{ggcn_forward.1} parent=1 // pred_check_branch
      %15 = sbr.rel (0) target = $region5
    $region4: #{ggcn_forward.1} parent=1 // pred_region
      _
    $region5: #{ggcn_forward.1} parent=1 // pred_fallthru
      _
    // Predicated region
    $region6: #{ggcn_forward.1} parent=1 // pred_check
      _
    $region7: #{ggcn_forward.1} parent=1 // pred_check_branch
      %17 = sbr.rel (0) target = $region9
    $region8: #{ggcn_forward.1} parent=1 // pred_region
      _
    $region9: #{ggcn_forward.1} parent=1 // pred_fallthru
      _
    // Predicated region
    $region10: #{ggcn_forward.1} parent=1 // pred_check
      _
    $region11: #{ggcn_forward.1} parent=1 // pred_check_branch
      %19 = sbr.rel (0) target = $region13
    $region12: #{ggcn_forward.1} parent=1 // pred_region
      _
    $region13: #{ggcn_forward.1} parent=1 // pred_fallthru
      _
    // Predicated region
    $region14: #{ggcn_forward.1} parent=1 // pred_check
      _
    $region15: #{ggcn_forward.1} parent=1 // pred_check_branch
      %21 = sbr.rel (0) target = $region17
    $region16: #{ggcn_forward.1} parent=1 // pred_region
      _
    $region17: #{ggcn_forward.1} parent=1 // pred_fallthru
      _
    // Predicated region
    $region18: #{ggcn_forward.1} parent=1 // pred_check
      _
    $region19: #{ggcn_forward.1} parent=1 // pred_check_branch
      %23 = sbr.rel (0) target = $region21
    $region20: #{ggcn_forward.1} parent=1 // pred_region
      _
    $region21: #{ggcn_forward.1} parent=1 // pred_fallthru
      _
    // Predicated region
    $region22: #{ggcn_forward.1} parent=1 // pred_check
      _
    $region23: #{ggcn_forward.1} parent=1 // pred_check_branch
      %25 = sbr.rel (0) target = $region25
    $region24: #{ggcn_forward.1} parent=1 // pred_region
      _
    $region25: #{ggcn_forward.1} parent=1 // pred_fallthru
      _
    // Predicated region
    $region26: #{ggcn_forward.1} parent=1 // pred_check
      _
    $region27: #{ggcn_forward.1} parent=1 // pred_check_branch
      %27 = sbr.rel (0) target = $region29
    $region28: #{ggcn_forward.1} parent=1 // pred_region
      %s29 = ssub.s32 9088, 9088
      %30 = vsyncadd [#allocation4], %s29
      %s31 = sshll.u32 [#allocation3], 4
      %s32 = int_to_ptr.vmem [resolvable:$true] %s31
      %37 = dma.hbm_to_vmem [thread:$0]  %s6, 9088, %s32, [#allocation4], 128, 128, 8
    $region29: #{ggcn_forward.1} parent=1 // pred_fallthru
      _
    // Predicated region
    $region30: #{ggcn_forward.1} parent=1 // pred_check
      _
    $region31: #{ggcn_forward.1} parent=1 // pred_check_branch
      %39 = sbr.rel (0) target = $region33
    $region32: #{ggcn_forward.1} parent=1 // pred_region
      %40 = dma.done [#allocation4], 9088
    $region33: #{ggcn_forward.1} parent=1 // pred_fallthru
      _
    %s41 = sld [smem:[#allocation2]]
    %v42 = vld [vmem:[%s1] sm:$0xff]
    %v43 = vld [vmem:[%s1 + $0x8] sm:$0xf]
    %v44 = vld [vmem:[#allocation3] sm:$0xff]
    %v45 = vld [vmem:[#allocation3 + $0x8] sm:$0xff]
    %v46 = vld [vmem:[#allocation3 + $0x10] sm:$0xff]
    %v47 = vld [vmem:[#allocation3 + $0x18] sm:$0xff]
    %v48 = vld [vmem:[#allocation3 + $0x20] sm:$0x1]
    %v49 = vlaneseq
    %v50 = vshrl.u32 %v49, 7
    %v51 = vsub.s32 0, %v50
    %v52 = vrot.slane %v48, %v51
    %vm53 = vcmask 261120
    %v55 = vsel %vm53, %v42, 0
    %v58 = vsel %vm53, %v43, 0
    %60 = vmatprep.subr.mxu0 0.0
    %61 = vmatpush1.msra.mxu0 %v44
    %62 = vmatprep.subr.mxu0 0.0
    %63 = vmatpush1.msra.mxu0 %v45
    %64 = vmatprep.subr.mxu0 0.0
    %65 = vmatpush1.msra.mxu0 %v46
    %66 = vmatprep.subr.mxu0 0.0
    %67 = vmatpush1.msra.mxu0 %v47
    %68 = vmatprep.subr.mxu0 0.0
    %69 = vmatpush1.msra.mxu0 0.0
    %70 = vmatprep.subr.mxu0 0.0
    %71 = vmatpush1.msra.mxu0 0.0
    %72 = vmatprep.subr.mxu0 0.0
    %73 = vmatpush1.msra.mxu0 0.0
    %74 = vmatprep.subr.mxu0 0.0
    %75 = vmatpush1.msra.mxu0 0.0
    %76 = vmatprep.subr.mxu0 0.0
    %77 = vmatpush1.msra.mxu0 0.0
    %78 = vmatprep.subr.mxu0 0.0
    %79 = vmatpush1.msra.mxu0 0.0
    %80 = vmatprep.subr.mxu0 0.0
    %81 = vmatpush1.msra.mxu0 0.0
    %82 = vmatprep.subr.mxu0 0.0
    %83 = vmatpush1.msra.mxu0 0.0
    %84 = vmatprep.subr.mxu0 0.0
    %85 = vmatpush1.msra.mxu0 0.0
    %86 = vmatprep.subr.mxu0 0.0
    %87 = vmatpush1.msra.mxu0 0.0
    %88 = vmatprep.subr.mxu0 0.0
    %89 = vmatpush1.msra.mxu0 0.0
    %90 = vmatprep.subr.mxu0 0.0
    %91 = vmatpush1.msra.mxu0 0.0
    %92 = vmatprep.subr.mxu0 0.0
    %93 = vmatpush1.msra.mxu0 0.0
    %94 = vmatprep.subr.mxu0 0.0
    %95 = vmatpush1.msra.mxu0 0.0
    %96 = vmatprep.subr.mxu0 0.0
    %97 = vmatpush1.msra.mxu0 0.0
    %98 = vmatprep.subr.mxu0 0.0
    %99 = vmatpush1.msra.mxu0 0.0
    %100 = vmatprep.subr.mxu0 0.0
    %101 = vmatpush1.msra.mxu0 0.0
    %102 = vmatprep.subr.mxu0 0.0
    %103 = vmatpush1.msra.mxu0 0.0
    %104 = vmatprep.subr.mxu0 0.0
    %105 = vmatpush1.msra.mxu0 0.0
    %106 = vmatprep.subr.mxu0 0.0
    %107 = vmatpush1.msra.mxu0 0.0
    %108 = vmatprep.subr.mxu0 0.0
    %109 = vmatpush1.msra.mxu0 0.0
    %110 = vmatprep.subr.mxu0 0.0
    %111 = vmatpush1.msra.mxu0 0.0
    %112 = vmatprep.subr.mxu0 0.0
    %113 = vmatpush1.msra.mxu0 0.0
    %114 = vmatprep.subr.mxu0 0.0
    %115 = vmatpush1.msra.mxu0 0.0
    %116 = vmatprep.subr.mxu0 0.0
    %117 = vmatpush1.msra.mxu0 0.0
    %118 = vmatprep.subr.mxu0 0.0
    %119 = vmatpush1.msra.mxu0 0.0
    %120 = vmatprep.subr.mxu0 0.0
    %121 = vmatpush1.msra.mxu0 0.0
    %122 = vmatprep.subr.mxu0 0.0
    %123 = vmatpush1.msra.mxu0 0.0
    %124 = vmatprep.mubr.f32.mxu0 0.0
    %125 = vmatmul.mubr.f32.gmra.mrb[0].mxu0 %v55
    %v126 = vpop.f32.mrb[0].mxu0
    %v127 = vadd.f32 %v52, %v126
    %v128 = vpop.f32.mrb[0].mxu0
    %129 = vmatprep.mubr.f32.mxu0 0.0
    %130 = vmatmul.mubr.f32.gmra.mrb[0].mxu0 %v58
    %v131 = vpop.f32.mrb[0].mxu0
    %v132 = vadd.f32 %v52, %v131
    %v133 = vpop.f32.mrb[0].mxu0
    %134 = vdwg.mxu0
    %v135 = vld [vmem:[#allocation3 + $0x28] sm:$0xff]
    %v136 = vld [vmem:[#allocation3 + $0x30] sm:$0xff]
    %v137 = vld [vmem:[#allocation3 + $0x38] sm:$0xff]
    %v138 = vld [vmem:[#allocation3 + $0x40] sm:$0xff]
    %v139 = vld [vmem:[#allocation3 + $0x48] sm:$0x1]
    %v140 = vlaneseq
    %v141 = vshrl.u32 %v140, 7
    %v142 = vsub.s32 0, %v141
    %v143 = vrot.slane %v139, %v142
    %144 = vmatprep.subr.mxu0 0.0
    %145 = vmatpush1.msra.mxu0 %v135
    %146 = vmatprep.subr.mxu0 0.0
    %147 = vmatpush1.msra.mxu0 %v136
    %148 = vmatprep.subr.mxu0 0.0
    %149 = vmatpush1.msra.mxu0 %v137
    %150 = vmatprep.subr.mxu0 0.0
    %151 = vmatpush1.msra.mxu0 %v138
    %152 = vmatprep.subr.mxu0 0.0
    %153 = vmatpush1.msra.mxu0 0.0
    %154 = vmatprep.subr.mxu0 0.0
    %155 = vmatpush1.msra.mxu0 0.0
    %156 = vmatprep.subr.mxu0 0.0
    %157 = vmatpush1.msra.mxu0 0.0
    %158 = vmatprep.subr.mxu0 0.0
    %159 = vmatpush1.msra.mxu0 0.0
    %160 = vmatprep.subr.mxu0 0.0
    %161 = vmatpush1.msra.mxu0 0.0
    %162 = vmatprep.subr.mxu0 0.0
    %163 = vmatpush1.msra.mxu0 0.0
    %164 = vmatprep.subr.mxu0 0.0
    %165 = vmatpush1.msra.mxu0 0.0
    %166 = vmatprep.subr.mxu0 0.0
    %167 = vmatpush1.msra.mxu0 0.0
    %168 = vmatprep.subr.mxu0 0.0
    %169 = vmatpush1.msra.mxu0 0.0
    %170 = vmatprep.subr.mxu0 0.0
    %171 = vmatpush1.msra.mxu0 0.0
    %172 = vmatprep.subr.mxu0 0.0
    %173 = vmatpush1.msra.mxu0 0.0
    %174 = vmatprep.subr.mxu0 0.0
    %175 = vmatpush1.msra.mxu0 0.0
    %176 = vmatprep.subr.mxu0 0.0
    %177 = vmatpush1.msra.mxu0 0.0
    %178 = vmatprep.subr.mxu0 0.0
    %179 = vmatpush1.msra.mxu0 0.0
    %180 = vmatprep.subr.mxu0 0.0
    %181 = vmatpush1.msra.mxu0 0.0
    %182 = vmatprep.subr.mxu0 0.0
    %183 = vmatpush1.msra.mxu0 0.0
    %184 = vmatprep.subr.mxu0 0.0
    %185 = vmatpush1.msra.mxu0 0.0
    %186 = vmatprep.subr.mxu0 0.0
    %187 = vmatpush1.msra.mxu0 0.0
    %188 = vmatprep.subr.mxu0 0.0
    %189 = vmatpush1.msra.mxu0 0.0
    %190 = vmatprep.subr.mxu0 0.0
    %191 = vmatpush1.msra.mxu0 0.0
    %192 = vmatprep.subr.mxu0 0.0
    %193 = vmatpush1.msra.mxu0 0.0
    %194 = vmatprep.subr.mxu0 0.0
    %195 = vmatpush1.msra.mxu0 0.0
    %196 = vmatprep.subr.mxu0 0.0
    %197 = vmatpush1.msra.mxu0 0.0
    %198 = vmatprep.subr.mxu0 0.0
    %199 = vmatpush1.msra.mxu0 0.0
    %200 = vmatprep.subr.mxu0 0.0
    %201 = vmatpush1.msra.mxu0 0.0
    %202 = vmatprep.subr.mxu0 0.0
    %203 = vmatpush1.msra.mxu0 0.0
    %204 = vmatprep.subr.mxu0 0.0
    %205 = vmatpush1.msra.mxu0 0.0
    %206 = vmatprep.subr.mxu0 0.0
    %207 = vmatpush1.msra.mxu0 0.0
    %208 = vmatprep.mubr.f32.mxu0 0.0
    %209 = vmatmul.mubr.f32.gmra.mrb[0].mxu0 %v55
    %v210 = vpop.f32.mrb[0].mxu0
    %v211 = vadd.f32 %v143, %v210
    %v212 = vpop.f32.mrb[0].mxu0
    %213 = vmatprep.mubr.f32.mxu0 0.0
    %214 = vmatmul.mubr.f32.gmra.mrb[0].mxu0 %v58
    %v215 = vpop.f32.mrb[0].mxu0
    %v216 = vadd.f32 %v143, %v215
    %v217 = vpop.f32.mrb[0].mxu0
    %218 = vdwg.mxu0
    %v219 = vxor.u32 %v211, 2147483648
    %v220 = vxor.u32 %v216, 2147483648
    %v221 = vmul.f32 %v219, 1.442695
    %v222 = vpow.pop %v221
    %v223 = vmul.f32 %v220, 1.442695
    %v224 = vpow.pop %v223
    %v225 = vadd.f32 %v222, 1.0
    %v226 = vadd.f32 %v224, 1.0
    %v227 = vrcp.pop %v225
    %v228 = vmul.f32 1.0, %v227
    %v229 = vrcp.pop %v226
    %v230 = vmul.f32 1.0, %v229
    %232 = vset.pattern.permute.xlu0 0
    %233 = vperm.xlu0 %232, %v228
    %v234 = vpop.permute.xlu0 %233
    %237 = vset.pattern.permute.xlu0 0
    %238 = vperm.xlu0 %237, %v230
    %v239 = vpop.permute.xlu0 %238
    %v241 = vmul.f32 %v127, %v234
    %v242 = vmul.f32 %v132, %v239
    %243 = vset.pattern.permute.xlu0 1
    %244 = vperm.xlu0 %243, %v228
    %v245 = vpop.permute.xlu0 %244
    %247 = vset.pattern.permute.xlu0 1
    %248 = vperm.xlu0 %247, %v230
    %v249 = vpop.permute.xlu0 %248
    %v251 = vmul.f32 %v127, %v245
    %v252 = vmul.f32 %v132, %v249
    %253 = vset.pattern.permute.xlu0 2
    %254 = vperm.xlu0 %253, %v228
    %v255 = vpop.permute.xlu0 %254
    %257 = vset.pattern.permute.xlu0 2
    %258 = vperm.xlu0 %257, %v230
    %v259 = vpop.permute.xlu0 %258
    %v261 = vmul.f32 %v127, %v255
    %v262 = vmul.f32 %v132, %v259
    %vm265 = vcmask 1043456
    %v266 = vrot.slane %v251, 4
    %v267 = vrot.slane %v252, 4
    %v268 = vsel %vm265, %v266, %v267
    %269 = vrot.lane.b32.xlu0 %v266, 96
    %v270 = vpop.permute.xlu0 %269
    %271 = vrot.lane.b32.xlu0 %v268, 96
    %v272 = vpop.permute.xlu0 %271
    %277 = vrot.lane.b32.xlu0 %v261, 64
    %v278 = vpop.permute.xlu0 %277
    %279 = vrot.lane.b32.xlu0 %v262, 64
    %v280 = vpop.permute.xlu0 %279
    %v282 = vsel %vm265, %v242, %v270
    %v283 = vld [vmem:[%s2] sm:$0xff]
    %v284 = vld [vmem:[%s2 + $0x8] sm:$0xf]
    %vm285 = vcmask 293888
    %v287 = vsel %vm285, %v283, 0
    %v290 = vsel %vm285, %v284, 0
    %v292 = vsel %vm265, %v280, 0
    %294 = vmatprep.subr.mxu0 0.0
    %295 = vmatpush1.msra.mxu0 %v241
    %296 = vmatprep.subr.mxu0 0.0
    %297 = vmatpush1.msra.mxu0 %v282
    %298 = vmatprep.subr.mxu0 0.0
    %299 = vmatpush1.msra.mxu0 %v272
    %300 = vmatprep.subr.mxu0 0.0
    %301 = vmatpush1.msra.mxu0 %v278
    %302 = vmatprep.subr.mxu0 0.0
    %303 = vmatpush1.msra.mxu0 %v292
    %304 = vmatprep.subr.mxu0 0.0
    %305 = vmatpush1.msra.mxu0 0.0
    %306 = vmatprep.subr.mxu0 0.0
    %307 = vmatpush1.msra.mxu0 0.0
    %308 = vmatprep.subr.mxu0 0.0
    %309 = vmatpush1.msra.mxu0 0.0
    %310 = vmatprep.subr.mxu0 0.0
    %311 = vmatpush1.msra.mxu0 0.0
    %312 = vmatprep.subr.mxu0 0.0
    %313 = vmatpush1.msra.mxu0 0.0
    %314 = vmatprep.subr.mxu0 0.0
    %315 = vmatpush1.msra.mxu0 0.0
    %316 = vmatprep.subr.mxu0 0.0
    %317 = vmatpush1.msra.mxu0 0.0
    %318 = vmatprep.subr.mxu0 0.0
    %319 = vmatpush1.msra.mxu0 0.0
    %320 = vmatprep.subr.mxu0 0.0
    %321 = vmatpush1.msra.mxu0 0.0
    %322 = vmatprep.subr.mxu0 0.0
    %323 = vmatpush1.msra.mxu0 0.0
    %324 = vmatprep.subr.mxu0 0.0
    %325 = vmatpush1.msra.mxu0 0.0
    %326 = vmatprep.subr.mxu0 0.0
    %327 = vmatpush1.msra.mxu0 0.0
    %328 = vmatprep.subr.mxu0 0.0
    %329 = vmatpush1.msra.mxu0 0.0
    %330 = vmatprep.subr.mxu0 0.0
    %331 = vmatpush1.msra.mxu0 0.0
    %332 = vmatprep.subr.mxu0 0.0
    %333 = vmatpush1.msra.mxu0 0.0
    %334 = vmatprep.subr.mxu0 0.0
    %335 = vmatpush1.msra.mxu0 0.0
    %336 = vmatprep.subr.mxu0 0.0
    %337 = vmatpush1.msra.mxu0 0.0
    %338 = vmatprep.subr.mxu0 0.0
    %339 = vmatpush1.msra.mxu0 0.0
    %340 = vmatprep.subr.mxu0 0.0
    %341 = vmatpush1.msra.mxu0 0.0
    %342 = vmatprep.subr.mxu0 0.0
    %343 = vmatpush1.msra.mxu0 0.0
    %344 = vmatprep.subr.mxu0 0.0
    %345 = vmatpush1.msra.mxu0 0.0
    %346 = vmatprep.subr.mxu0 0.0
    %347 = vmatpush1.msra.mxu0 0.0
    %348 = vmatprep.subr.mxu0 0.0
    %349 = vmatpush1.msra.mxu0 0.0
    %350 = vmatprep.subr.mxu0 0.0
    %351 = vmatpush1.msra.mxu0 0.0
    %352 = vmatprep.subr.mxu0 0.0
    %353 = vmatpush1.msra.mxu0 0.0
    %354 = vmatprep.subr.mxu0 0.0
    %355 = vmatpush1.msra.mxu0 0.0
    %356 = vmatprep.subr.mxu0 0.0
    %357 = vmatpush1.msra.mxu0 0.0
    %358 = vmatprep.mubr.f32.mxu0 0.0
    %359 = vmatmul.mubr.f32.gmra.mrb[0].mxu0 %v287
    %v360 = vpop.f32.mrb[0].mxu0
    %v361 = vadd.f32 0.0, %v360
    %v362 = vpop.f32.mrb[0].mxu0
    %363 = vmatprep.mubr.f32.mxu0 0.0
    %364 = vmatmul.mubr.f32.gmra.mrb[0].mxu0 %v290
    %v365 = vpop.f32.mrb[0].mxu0
    %v366 = vadd.f32 0.0, %v365
    %v367 = vpop.f32.mrb[0].mxu0
    %368 = vdwg.mxu0
    %vm369 = vcmp.gt.f32.partialorder %v361, 0.0
    %vm370 = vcmp.gt.f32.partialorder %v366, 0.0
    %v371 = vstv %s41
    %v372 = vmul.f32 %v371, %v361
    %v373 = vmul.f32 %v371, %v366
    %v374 = vsel %vm369, %v361, %v372
    %v375 = vsel %vm370, %v366, %v373
    %v376 = vld [vmem:[%s3] sm:$0xff]
    %v377 = vld [vmem:[#allocation3 + $0x50] sm:$0xff]
    %v378 = vld [vmem:[#allocation3 + $0x58] sm:$0xff]
    %v379 = vld [vmem:[#allocation3 + $0x60] sm:$0xff]
    %v380 = vld [vmem:[#allocation3 + $0x68] sm:$0xff]
    %v381 = vld [vmem:[#allocation3 + $0x70] sm:$0xff]
    %v382 = vld [vmem:[#allocation3 + $0x78] sm:$0xff]
    %v383 = vld [vmem:[#allocation3 + $0x80] sm:$0xff]
    %v384 = vld [vmem:[#allocation3 + $0x88] sm:$0xff]
    %v385 = vld [vmem:[#allocation3 + $0x90] sm:$0xff]
    %v386 = vld [vmem:[#allocation3 + $0x98] sm:$0xff]
    %v387 = vld [vmem:[#allocation3 + $0xa0] sm:$0xff]
    %v388 = vld [vmem:[#allocation3 + $0xa8] sm:$0xff]
    %v389 = vld [vmem:[#allocation3 + $0xb0] sm:$0xff]
    %v390 = vld [vmem:[#allocation3 + $0xb8] sm:$0xff]
    %v391 = vld [vmem:[#allocation3 + $0xc0] sm:$0xff]
    %v392 = vld [vmem:[#allocation3 + $0xc8] sm:$0xff]
    %v393 = vld [vmem:[#allocation3 + $0xd0] sm:$0xff]
    %394 = vmatprep.subr.mxu0 0.0
    %395 = vmatpush1.msra.mxu0 %v377
    %396 = vmatprep.subr.mxu0 0.0
    %397 = vmatpush1.msra.mxu0 %v378
    %398 = vmatprep.subr.mxu0 0.0
    %399 = vmatpush1.msra.mxu0 %v379
    %400 = vmatprep.subr.mxu0 0.0
    %401 = vmatpush1.msra.mxu0 %v380
    %402 = vmatprep.subr.mxu0 0.0
    %403 = vmatpush1.msra.mxu0 %v381
    %404 = vmatprep.subr.mxu0 0.0
    %405 = vmatpush1.msra.mxu0 %v382
    %406 = vmatprep.subr.mxu0 0.0
    %407 = vmatpush1.msra.mxu0 %v383
    %408 = vmatprep.subr.mxu0 0.0
    %409 = vmatpush1.msra.mxu0 %v384
    %410 = vmatprep.subr.mxu0 0.0
    %411 = vmatpush1.msra.mxu0 %v385
    %412 = vmatprep.subr.mxu0 0.0
    %413 = vmatpush1.msra.mxu0 %v386
    %414 = vmatprep.subr.mxu0 0.0
    %415 = vmatpush1.msra.mxu0 %v387
    %416 = vmatprep.subr.mxu0 0.0
    %417 = vmatpush1.msra.mxu0 %v388
    %418 = vmatprep.subr.mxu0 0.0
    %419 = vmatpush1.msra.mxu0 %v389
    %420 = vmatprep.subr.mxu0 0.0
    %421 = vmatpush1.msra.mxu0 %v390
    %422 = vmatprep.subr.mxu0 0.0
    %423 = vmatpush1.msra.mxu0 %v391
    %424 = vmatprep.subr.mxu0 0.0
    %425 = vmatpush1.msra.mxu0 %v392
    %426 = vmatprep.subr.mxu0 0.0
    %427 = vmatpush1.msra.mxu0 0.0
    %428 = vmatprep.subr.mxu0 0.0
    %429 = vmatpush1.msra.mxu0 0.0
    %430 = vmatprep.subr.mxu0 0.0
    %431 = vmatpush1.msra.mxu0 0.0
    %432 = vmatprep.subr.mxu0 0.0
    %433 = vmatpush1.msra.mxu0 0.0
    %434 = vmatprep.subr.mxu0 0.0
    %435 = vmatpush1.msra.mxu0 0.0
    %436 = vmatprep.subr.mxu0 0.0
    %437 = vmatpush1.msra.mxu0 0.0
    %438 = vmatprep.subr.mxu0 0.0
    %439 = vmatpush1.msra.mxu0 0.0
    %440 = vmatprep.subr.mxu0 0.0
    %441 = vmatpush1.msra.mxu0 0.0
    %442 = vmatprep.subr.mxu0 0.0
    %443 = vmatpush1.msra.mxu0 0.0
    %444 = vmatprep.subr.mxu0 0.0
    %445 = vmatpush1.msra.mxu0 0.0
    %446 = vmatprep.subr.mxu0 0.0
    %447 = vmatpush1.msra.mxu0 0.0
    %448 = vmatprep.subr.mxu0 0.0
    %449 = vmatpush1.msra.mxu0 0.0
    %450 = vmatprep.subr.mxu0 0.0
    %451 = vmatpush1.msra.mxu0 0.0
    %452 = vmatprep.subr.mxu0 0.0
    %453 = vmatpush1.msra.mxu0 0.0
    %454 = vmatprep.subr.mxu0 0.0
    %455 = vmatpush1.msra.mxu0 0.0
    %456 = vmatprep.subr.mxu0 0.0
    %457 = vmatpush1.msra.mxu0 0.0
    %458 = vmatprep.mubr.f32.mxu0 0.0
    %459 = vmatmul.mubr.f32.gmra.mrb[0].mxu0 %v376
    %v460 = vpop.f32.mrb[0].mxu0
    %v461 = vadd.f32 %v393, %v460
    %v462 = vpop.f32.mrb[0].mxu0
    %463 = vdwg.mxu0
    %vm464 = vcmp.gt.f32.partialorder %v461, 0.0
    %v465 = vmul.f32 %v371, %v461
    %v466 = vsel %vm464, %v461, %v465
    %v467 = vsel %vm53, %v374, 0.0
    %vm468 = vcmask 257024
    %v469 = vsel %vm468, %v375, 0.0
    %v470 = vadd.f32 %v467, %v469
    %v471 = vrot.slane %v470, 4
    %v472 = vadd.f32 %v470, %v471
    %v473 = vrot.slane %v472, 2
    %v474 = vadd.f32 %v472, %v473
    %v475 = vrot.slane %v474, 1
    %v476 = vadd.f32 %v474, %v475
    %v477 = vld [vmem:[#allocation3 + $0xd8] sm:$0xff]
    %v478 = vld [vmem:[#allocation3 + $0xe0] sm:$0xff]
    %v479 = vld [vmem:[#allocation3 + $0xe8] sm:$0xff]
    %v480 = vld [vmem:[#allocation3 + $0xf0] sm:$0xff]
    %v481 = vld [vmem:[#allocation3 + $0xf8] sm:$0x1]
    %v483 = vsel %vm53, %v476, 0
    %485 = vmatprep.subr.mxu0 0.0
    %486 = vmatpush1.msra.mxu0 %v477
    %487 = vmatprep.subr.mxu0 0.0
    %488 = vmatpush1.msra.mxu0 %v478
    %489 = vmatprep.subr.mxu0 0.0
    %490 = vmatpush1.msra.mxu0 %v479
    %491 = vmatprep.subr.mxu0 0.0
    %492 = vmatpush1.msra.mxu0 %v480
    %493 = vmatprep.subr.mxu0 0.0
    %494 = vmatpush1.msra.mxu0 0.0
    %495 = vmatprep.subr.mxu0 0.0
    %496 = vmatpush1.msra.mxu0 0.0
    %497 = vmatprep.subr.mxu0 0.0
    %498 = vmatpush1.msra.mxu0 0.0
    %499 = vmatprep.subr.mxu0 0.0
    %500 = vmatpush1.msra.mxu0 0.0
    %501 = vmatprep.subr.mxu0 0.0
    %502 = vmatpush1.msra.mxu0 0.0
    %503 = vmatprep.subr.mxu0 0.0
    %504 = vmatpush1.msra.mxu0 0.0
    %505 = vmatprep.subr.mxu0 0.0
    %506 = vmatpush1.msra.mxu0 0.0
    %507 = vmatprep.subr.mxu0 0.0
    %508 = vmatpush1.msra.mxu0 0.0
    %509 = vmatprep.subr.mxu0 0.0
    %510 = vmatpush1.msra.mxu0 0.0
    %511 = vmatprep.subr.mxu0 0.0
    %512 = vmatpush1.msra.mxu0 0.0
    %513 = vmatprep.subr.mxu0 0.0
    %514 = vmatpush1.msra.mxu0 0.0
    %515 = vmatprep.subr.mxu0 0.0
    %516 = vmatpush1.msra.mxu0 0.0
    %517 = vmatprep.subr.mxu0 0.0
    %518 = vmatpush1.msra.mxu0 0.0
    %519 = vmatprep.subr.mxu0 0.0
    %520 = vmatpush1.msra.mxu0 0.0
    %521 = vmatprep.subr.mxu0 0.0
    %522 = vmatpush1.msra.mxu0 0.0
    %523 = vmatprep.subr.mxu0 0.0
    %524 = vmatpush1.msra.mxu0 0.0
    %525 = vmatprep.subr.mxu0 0.0
    %526 = vmatpush1.msra.mxu0 0.0
    %527 = vmatprep.subr.mxu0 0.0
    %528 = vmatpush1.msra.mxu0 0.0
    %529 = vmatprep.subr.mxu0 0.0
    %530 = vmatpush1.msra.mxu0 0.0
    %531 = vmatprep.subr.mxu0 0.0
    %532 = vmatpush1.msra.mxu0 0.0
    %533 = vmatprep.subr.mxu0 0.0
    %534 = vmatpush1.msra.mxu0 0.0
    %535 = vmatprep.subr.mxu0 0.0
    %536 = vmatpush1.msra.mxu0 0.0
    %537 = vmatprep.subr.mxu0 0.0
    %538 = vmatpush1.msra.mxu0 0.0
    %539 = vmatprep.subr.mxu0 0.0
    %540 = vmatpush1.msra.mxu0 0.0
    %541 = vmatprep.subr.mxu0 0.0
    %542 = vmatpush1.msra.mxu0 0.0
    %543 = vmatprep.subr.mxu0 0.0
    %544 = vmatpush1.msra.mxu0 0.0
    %545 = vmatprep.subr.mxu0 0.0
    %546 = vmatpush1.msra.mxu0 0.0
    %547 = vmatprep.subr.mxu0 0.0
    %548 = vmatpush1.msra.mxu0 0.0
    %549 = vmatprep.mubr.f32.mxu0 0.0
    %550 = vmatmul.mubr.f32.gmra.mrb[0].mxu0 %v483
    %v551 = vpop.f32.mrb[0].mxu0
    %v552 = vadd.f32 %v481, %v551
    %v553 = vpop.f32.mrb[0].mxu0
    %554 = vdwg.mxu0
    %vm555 = vcmp.gt.f32.partialorder %v552, 0.0
    %v556 = vmul.f32 %v371, %v552
    %v557 = vsel %vm555, %v552, %v556
    %v558 = vld [vmem:[#allocation3 + $0x100] sm:$0x3]
    %v559 = vmul.f32 %v557, %v558
    %vm560 = vcmask 253952
    %v561 = vsel %vm560, %v559, 0.0
    %562 = vadd.xlane.f32.xlu0 %v561
    %v563 = vpop.xlane.xlu0 %562
    %v564 = vld [vmem:[#allocation3 + $0x108] sm:$0x1]
    %v565 = vadd.f32 %v563, %v564
    %v566 = vlaneseq
    %v567 = vshrl.u32 %v566, 7
    %v568 = vsub.s32 1, %v567
    %v569 = vrot.slane %v558, %v568
    %v570 = vmul.f32 %v466, %v569
    %vm571 = vcmask 258049
    %v572 = vsel %vm571, %v570, 0.0
    %573 = vadd.xlane.f32.xlu0 %v572
    %v574 = vpop.xlane.xlu0 %573
    %v575 = vlaneseq
    %v576 = vshrl.u32 %v575, 7
    %v577 = vsub.s32 0, %v576
    %v578 = vrot.slane %v565, %v577
    %v579 = vadd.f32 %v574, %v578
    %vm580 = vcmask 4097
    %v581 = vsel %vm580, %v579, -inf
    %v582 = vrot.slane %v581, 4
    %v583 = vmax.f32 %v581, %v582
    %v584 = vrot.slane %v583, 2
    %v585 = vmax.f32 %v583, %v584
    %v586 = vrot.slane %v585, 1
    %v587 = vmax.f32 %v585, %v586
    %v588 = vsub.f32 %v579, %v587
    %v589 = vmul.f32 %v588, 1.442695
    %v590 = vpow.pop %v589
    %v592 = vrot.slane %v590, 1
    %vm594 = vcmask 3072
    %v595 = vsel %vm594, %v592, 0.0
    %v596 = vrot.slane %v595, 4
    %v597 = vadd.f32 %v595, %v596
    %v598 = vrot.slane %v597, 2
    %v599 = vadd.f32 %v597, %v598
    %v600 = vrot.slane %v599, 1
    %v601 = vadd.f32 %v599, %v600
    %v602 = vrcp.pop %v601
    %v603 = vmul.f32 %v590, %v602
    %605 = vset.pattern.permute.xlu0 0
    %606 = vperm.xlu0 %605, %v603
    %v607 = vpop.permute.xlu0 %606
    %v609 = vmul.f32 %v607, %v466
    %v611 = vrot.slane %v609, 1
    %v613 = vsel %vm468, %v611, 0.0
    %v614 = vrot.slane %v613, 4
    %v615 = vadd.f32 %v613, %v614
    %v616 = vrot.slane %v615, 2
    %v617 = vadd.f32 %v615, %v616
    %v618 = vrot.slane %v617, 1
    %v619 = vadd.f32 %v617, %v618
    %v620 = vld [vmem:[%s4] sm:$0x1]
    %v621 = vld [vmem:[%s4 + $0x1] sm:$0x1]
    %623 = vrot.lane.b32.xlu0 %v620, 32
    %v624 = vpop.permute.xlu0 %623
    %v626 = vsel %vm53, %v557, %v624
    %v627 = vld [vmem:[#allocation3 + $0x110] sm:$0xff]
    %v628 = vld [vmem:[#allocation3 + $0x118] sm:$0xff]
    %v629 = vld [vmem:[#allocation3 + $0x120] sm:$0xff]
    %v630 = vld [vmem:[#allocation3 + $0x128] sm:$0xff]
    %v631 = vld [vmem:[#allocation3 + $0x130] sm:$0xff]
    %v632 = vld [vmem:[#allocation3 + $0x138] sm:$0xff]
    %v633 = vld [vmem:[#allocation3 + $0x140] sm:$0xff]
    %v634 = vld [vmem:[#allocation3 + $0x148] sm:$0xff]
    %v635 = vld [vmem:[#allocation3 + $0x150] sm:$0x1]
    %vm636 = vcmask 523264
    %v638 = vsel %vm636, %v626, 0
    %640 = vmatprep.subr.mxu0 0.0
    %641 = vmatpush1.msra.mxu0 %v627
    %642 = vmatprep.subr.mxu0 0.0
    %643 = vmatpush1.msra.mxu0 %v628
    %644 = vmatprep.subr.mxu0 0.0
    %645 = vmatpush1.msra.mxu0 %v629
    %646 = vmatprep.subr.mxu0 0.0
    %647 = vmatpush1.msra.mxu0 %v630
    %648 = vmatprep.subr.mxu0 0.0
    %649 = vmatpush1.msra.mxu0 %v631
    %650 = vmatprep.subr.mxu0 0.0
    %651 = vmatpush1.msra.mxu0 %v632
    %652 = vmatprep.subr.mxu0 0.0
    %653 = vmatpush1.msra.mxu0 %v633
    %654 = vmatprep.subr.mxu0 0.0
    %655 = vmatpush1.msra.mxu0 %v634
    %656 = vmatprep.subr.mxu0 0.0
    %657 = vmatpush1.msra.mxu0 0.0
    %658 = vmatprep.subr.mxu0 0.0
    %659 = vmatpush1.msra.mxu0 0.0
    %660 = vmatprep.subr.mxu0 0.0
    %661 = vmatpush1.msra.mxu0 0.0
    %662 = vmatprep.subr.mxu0 0.0
    %663 = vmatpush1.msra.mxu0 0.0
    %664 = vmatprep.subr.mxu0 0.0
    %665 = vmatpush1.msra.mxu0 0.0
    %666 = vmatprep.subr.mxu0 0.0
    %667 = vmatpush1.msra.mxu0 0.0
    %668 = vmatprep.subr.mxu0 0.0
    %669 = vmatpush1.msra.mxu0 0.0
    %670 = vmatprep.subr.mxu0 0.0
    %671 = vmatpush1.msra.mxu0 0.0
    %672 = vmatprep.subr.mxu0 0.0
    %673 = vmatpush1.msra.mxu0 0.0
    %674 = vmatprep.subr.mxu0 0.0
    %675 = vmatpush1.msra.mxu0 0.0
    %676 = vmatprep.subr.mxu0 0.0
    %677 = vmatpush1.msra.mxu0 0.0
    %678 = vmatprep.subr.mxu0 0.0
    %679 = vmatpush1.msra.mxu0 0.0
    %680 = vmatprep.subr.mxu0 0.0
    %681 = vmatpush1.msra.mxu0 0.0
    %682 = vmatprep.subr.mxu0 0.0
    %683 = vmatpush1.msra.mxu0 0.0
    %684 = vmatprep.subr.mxu0 0.0
    %685 = vmatpush1.msra.mxu0 0.0
    %686 = vmatprep.subr.mxu0 0.0
    %687 = vmatpush1.msra.mxu0 0.0
    %688 = vmatprep.subr.mxu0 0.0
    %689 = vmatpush1.msra.mxu0 0.0
    %690 = vmatprep.subr.mxu0 0.0
    %691 = vmatpush1.msra.mxu0 0.0
    %692 = vmatprep.subr.mxu0 0.0
    %693 = vmatpush1.msra.mxu0 0.0
    %694 = vmatprep.subr.mxu0 0.0
    %695 = vmatpush1.msra.mxu0 0.0
    %696 = vmatprep.subr.mxu0 0.0
    %697 = vmatpush1.msra.mxu0 0.0
    %698 = vmatprep.subr.mxu0 0.0
    %699 = vmatpush1.msra.mxu0 0.0
    %700 = vmatprep.subr.mxu0 0.0
    %701 = vmatpush1.msra.mxu0 0.0
    %702 = vmatprep.subr.mxu0 0.0
    %703 = vmatpush1.msra.mxu0 0.0
    %704 = vmatprep.mubr.f32.mxu0 0.0
    %705 = vmatmul.mubr.f32.gmra.mrb[0].mxu0 %v638
    %v706 = vpop.f32.mrb[0].mxu0
    %v707 = vadd.f32 %v635, %v706
    %v708 = vpop.f32.mrb[0].mxu0
    %709 = vdwg.mxu0
    %v710 = vxor.u32 %v707, 2147483648
    %v711 = vmul.f32 %v710, 1.442695
    %v712 = vpow.pop %v711
    %v713 = vadd.f32 %v712, 1.0
    %v714 = vrcp.pop %v713
    %v715 = vmul.f32 1.0, %v714
    %v716 = vtanh.pop %v707
    %718 = vrot.lane.b32.xlu0 %v621, 32
    %v719 = vpop.permute.xlu0 %718
    %v721 = vmul.f32 %v715, %v719
    %723 = vrot.lane.b32.xlu0 %v716, 64
    %v724 = vpop.permute.xlu0 %723
    %v726 = vmul.f32 %v715, %v724
    %728 = vrot.lane.b32.xlu0 %v726, 32
    %v729 = vpop.permute.xlu0 %728
    %v731 = vadd.f32 %v721, %v729
    %v732 = vtanh.pop %v731
    %734 = vrot.lane.b32.xlu0 %v732, 64
    %v735 = vpop.permute.xlu0 %734
    %v737 = vmul.f32 %v715, %v735
    %739 = vrot.lane.b32.xlu0 %v737, 64
    %v740 = vpop.permute.xlu0 %739
    %743 = vrot.lane.b32.xlu0 %v619, 64
    %v744 = vpop.permute.xlu0 %743
    %747 = vrot.lane.b32.xlu0 %v466, 96
    %v748 = vpop.permute.xlu0 %747
    %v750 = vsel %vm53, %v557, %v740
    %v751 = vsel %vm636, %v750, %v744
    %vm752 = vcmask 785408
    %v753 = vsel %vm752, %v751, %v748
    %v754 = vld [vmem:[#allocation3 + $0x158] sm:$0xff]
    %v755 = vld [vmem:[#allocation3 + $0x160] sm:$0xff]
    %v756 = vld [vmem:[#allocation3 + $0x168] sm:$0xff]
    %v757 = vld [vmem:[#allocation3 + $0x170] sm:$0xff]
    %v758 = vld [vmem:[#allocation3 + $0x178] sm:$0xff]
    %v759 = vld [vmem:[#allocation3 + $0x180] sm:$0xff]
    %v760 = vld [vmem:[#allocation3 + $0x188] sm:$0xff]
    %v761 = vld [vmem:[#allocation3 + $0x190] sm:$0xff]
    %v762 = vld [vmem:[#allocation3 + $0x198] sm:$0xff]
    %v763 = vld [vmem:[#allocation3 + $0x1a0] sm:$0xff]
    %v764 = vld [vmem:[#allocation3 + $0x1a8] sm:$0xff]
    %v765 = vld [vmem:[#allocation3 + $0x1b0] sm:$0xff]
    %v766 = vld [vmem:[#allocation3 + $0x1b8] sm:$0xff]
    %v767 = vld [vmem:[#allocation3 + $0x1c0] sm:$0xff]
    %v768 = vld [vmem:[#allocation3 + $0x1c8] sm:$0xff]
    %v769 = vld [vmem:[#allocation3 + $0x1d0] sm:$0xff]
    %v770 = vld [vmem:[#allocation3 + $0x1d8] sm:$0x1]
    %771 = vmatprep.subr.mxu0 0.0
    %772 = vmatpush1.msra.mxu0 %v754
    %773 = vmatprep.subr.mxu0 0.0
    %774 = vmatpush1.msra.mxu0 %v755
    %775 = vmatprep.subr.mxu0 0.0
    %776 = vmatpush1.msra.mxu0 %v756
    %777 = vmatprep.subr.mxu0 0.0
    %778 = vmatpush1.msra.mxu0 %v757
    %779 = vmatprep.subr.mxu0 0.0
    %780 = vmatpush1.msra.mxu0 %v758
    %781 = vmatprep.subr.mxu0 0.0
    %782 = vmatpush1.msra.mxu0 %v759
    %783 = vmatprep.subr.mxu0 0.0
    %784 = vmatpush1.msra.mxu0 %v760
    %785 = vmatprep.subr.mxu0 0.0
    %786 = vmatpush1.msra.mxu0 %v761
    %787 = vmatprep.subr.mxu0 0.0
    %788 = vmatpush1.msra.mxu0 %v762
    %789 = vmatprep.subr.mxu0 0.0
    %790 = vmatpush1.msra.mxu0 %v763
    %791 = vmatprep.subr.mxu0 0.0
    %792 = vmatpush1.msra.mxu0 %v764
    %793 = vmatprep.subr.mxu0 0.0
    %794 = vmatpush1.msra.mxu0 %v765
    %795 = vmatprep.subr.mxu0 0.0
    %796 = vmatpush1.msra.mxu0 %v766
    %797 = vmatprep.subr.mxu0 0.0
    %798 = vmatpush1.msra.mxu0 %v767
    %799 = vmatprep.subr.mxu0 0.0
    %800 = vmatpush1.msra.mxu0 %v768
    %801 = vmatprep.subr.mxu0 0.0
    %802 = vmatpush1.msra.mxu0 %v769
    %803 = vmatprep.subr.mxu0 0.0
    %804 = vmatpush1.msra.mxu0 0.0
    %805 = vmatprep.subr.mxu0 0.0
    %806 = vmatpush1.msra.mxu0 0.0
    %807 = vmatprep.subr.mxu0 0.0
    %808 = vmatpush1.msra.mxu0 0.0
    %809 = vmatprep.subr.mxu0 0.0
    %810 = vmatpush1.msra.mxu0 0.0
    %811 = vmatprep.subr.mxu0 0.0
    %812 = vmatpush1.msra.mxu0 0.0
    %813 = vmatprep.subr.mxu0 0.0
    %814 = vmatpush1.msra.mxu0 0.0
    %815 = vmatprep.subr.mxu0 0.0
    %816 = vmatpush1.msra.mxu0 0.0
    %817 = vmatprep.subr.mxu0 0.0
    %818 = vmatpush1.msra.mxu0 0.0
    %819 = vmatprep.subr.mxu0 0.0
    %820 = vmatpush1.msra.mxu0 0.0
    %821 = vmatprep.subr.mxu0 0.0
    %822 = vmatpush1.msra.mxu0 0.0
    %823 = vmatprep.subr.mxu0 0.0
    %824 = vmatpush1.msra.mxu0 0.0
    %825 = vmatprep.subr.mxu0 0.0
    %826 = vmatpush1.msra.mxu0 0.0
    %827 = vmatprep.subr.mxu0 0.0
    %828 = vmatpush1.msra.mxu0 0.0
    %829 = vmatprep.subr.mxu0 0.0
    %830 = vmatpush1.msra.mxu0 0.0
    %831 = vmatprep.subr.mxu0 0.0
    %832 = vmatpush1.msra.mxu0 0.0
    %833 = vmatprep.subr.mxu0 0.0
    %834 = vmatpush1.msra.mxu0 0.0
    %835 = vmatprep.mubr.f32.mxu0 0.0
    %836 = vmatmul.mubr.f32.gmra.mrb[0].mxu0 %v753
    %v837 = vpop.f32.mrb[0].mxu0
    %v838 = vadd.f32 %v770, %v837
    %v839 = vpop.f32.mrb[0].mxu0
    %840 = vdwg.mxu0
    %vm841 = vcmp.gt.f32.partialorder %v838, 0.0
    %v842 = vmul.f32 %v371, %v838
    %v843 = vsel %vm841, %v838, %v842
    %v844 = vld [vmem:[%s5] sm:$0xf]
    %v845 = vld [vmem:[#allocation3 + $0x1e0] sm:$0xff]
    %v846 = vld [vmem:[#allocation3 + $0x1e8] sm:$0xff]
    %v847 = vld [vmem:[#allocation3 + $0x1f0] sm:$0xff]
    %v848 = vld [vmem:[#allocation3 + $0x1f8] sm:$0xff]
    %v849 = vld [vmem:[#allocation3 + $0x200] sm:$0x1]
    %v851 = vsel %vm53, %v843, 0
    %853 = vmatprep.subr.mxu0 0.0
    %854 = vmatpush1.msra.mxu0 %v845
    %855 = vmatprep.subr.mxu0 0.0
    %856 = vmatpush1.msra.mxu0 %v846
    %857 = vmatprep.subr.mxu0 0.0
    %858 = vmatpush1.msra.mxu0 %v847
    %859 = vmatprep.subr.mxu0 0.0
    %860 = vmatpush1.msra.mxu0 %v848
    %861 = vmatprep.subr.mxu0 0.0
    %862 = vmatpush1.msra.mxu0 0.0
    %863 = vmatprep.subr.mxu0 0.0
    %864 = vmatpush1.msra.mxu0 0.0
    %865 = vmatprep.subr.mxu0 0.0
    %866 = vmatpush1.msra.mxu0 0.0
    %867 = vmatprep.subr.mxu0 0.0
    %868 = vmatpush1.msra.mxu0 0.0
    %869 = vmatprep.subr.mxu0 0.0
    %870 = vmatpush1.msra.mxu0 0.0
    %871 = vmatprep.subr.mxu0 0.0
    %872 = vmatpush1.msra.mxu0 0.0
    %873 = vmatprep.subr.mxu0 0.0
    %874 = vmatpush1.msra.mxu0 0.0
    %875 = vmatprep.subr.mxu0 0.0
    %876 = vmatpush1.msra.mxu0 0.0
    %877 = vmatprep.subr.mxu0 0.0
    %878 = vmatpush1.msra.mxu0 0.0
    %879 = vmatprep.subr.mxu0 0.0
    %880 = vmatpush1.msra.mxu0 0.0
    %881 = vmatprep.subr.mxu0 0.0
    %882 = vmatpush1.msra.mxu0 0.0
    %883 = vmatprep.subr.mxu0 0.0
    %884 = vmatpush1.msra.mxu0 0.0
    %885 = vmatprep.subr.mxu0 0.0
    %886 = vmatpush1.msra.mxu0 0.0
    %887 = vmatprep.subr.mxu0 0.0
    %888 = vmatpush1.msra.mxu0 0.0
    %889 = vmatprep.subr.mxu0 0.0
    %890 = vmatpush1.msra.mxu0 0.0
    %891 = vmatprep.subr.mxu0 0.0
    %892 = vmatpush1.msra.mxu0 0.0
    %893 = vmatprep.subr.mxu0 0.0
    %894 = vmatpush1.msra.mxu0 0.0
    %895 = vmatprep.subr.mxu0 0.0
    %896 = vmatpush1.msra.mxu0 0.0
    %897 = vmatprep.subr.mxu0 0.0
    %898 = vmatpush1.msra.mxu0 0.0
    %899 = vmatprep.subr.mxu0 0.0
    %900 = vmatpush1.msra.mxu0 0.0
    %901 = vmatprep.subr.mxu0 0.0
    %902 = vmatpush1.msra.mxu0 0.0
    %903 = vmatprep.subr.mxu0 0.0
    %904 = vmatpush1.msra.mxu0 0.0
    %905 = vmatprep.subr.mxu0 0.0
    %906 = vmatpush1.msra.mxu0 0.0
    %907 = vmatprep.subr.mxu0 0.0
    %908 = vmatpush1.msra.mxu0 0.0
    %909 = vmatprep.subr.mxu0 0.0
    %910 = vmatpush1.msra.mxu0 0.0
    %911 = vmatprep.subr.mxu0 0.0
    %912 = vmatpush1.msra.mxu0 0.0
    %913 = vmatprep.subr.mxu0 0.0
    %914 = vmatpush1.msra.mxu0 0.0
    %915 = vmatprep.subr.mxu0 0.0
    %916 = vmatpush1.msra.mxu0 0.0
    %917 = vmatprep.mubr.f32.mxu0 0.0
    %918 = vmatmul.mubr.f32.gmra.mrb[0].mxu0 %v851
    %v919 = vpop.f32.mrb[0].mxu0
    %v920 = vadd.f32 %v849, %v919
    %v921 = vpop.f32.mrb[0].mxu0
    %922 = vdwg.mxu0
    %vm923 = vcmask 65536
    %v924 = vsel %vm923, %v920, -inf
    %925 = vmax.xlane.f32.xlu0 %v924
    %v926 = vpop.xlane.xlu0 %925
    %v927 = vsub.f32 %v920, %v926
    %v928 = vmul.f32 %v927, 1.442695
    %v929 = vpow.pop %v928
    %v930 = vsel %vm923, %v929, 0.0
    %931 = vadd.xlane.f32.xlu0 %v930
    %v932 = vpop.xlane.xlu0 %931
    %v933 = vrcp.pop %v932
    %v934 = vmul.f32 %v929, %v933
    %vm935 = vcmask 344336
    %v936 = vsel %vm935, %v920, -inf
    %937 = vmax.xlane.f32.xlu0 %v936
    %v938 = vpop.xlane.xlu0 %937
    %v939 = vsub.f32 %v920, %v938
    %v940 = vmul.f32 %v939, 1.442695
    %v941 = vpow.pop %v940
    %943 = vrot.lane.b32.xlu0 %v941, 94
    %v944 = vpop.permute.xlu0 %943
    %v946 = vsel %vm923, %v944, 0.0
    %947 = vadd.xlane.f32.xlu0 %v946
    %v948 = vpop.xlane.xlu0 %947
    %v949 = vrcp.pop %v948
    %v950 = vmul.f32 %v941, %v949
    %v951 = vadd.f32 %v934, %v844
    %v952 = vmul.f32 %v951, 100.0
    %v953 = vsel %vm923, %v952, -inf
    %954 = vmax.xlane.f32.xlu0 %v953
    %v955 = vpop.xlane.xlu0 %954
    %v956 = vsub.f32 %v952, %v955
    %v957 = vmul.f32 %v956, 1.442695
    %v958 = vpow.pop %v957
    %v959 = vsel %vm923, %v958, 0.0
    %960 = vadd.xlane.f32.xlu0 %v959
    %v961 = vpop.xlane.xlu0 %960
    %v962 = vrcp.pop %v961
    %v963 = vmul.f32 %v958, %v962
    %v965 = vrot.slane %v844, 1
    %966 = vrot.lane.b32.xlu0 %v965, 34
    %v967 = vpop.permute.xlu0 %966
    %v969 = vadd.f32 %v950, %v967
    %v970 = vmul.f32 %v969, 100.0
    %v971 = vsel %vm935, %v970, -inf
    %972 = vmax.xlane.f32.xlu0 %v971
    %v973 = vpop.xlane.xlu0 %972
    %v974 = vsub.f32 %v970, %v973
    %v975 = vmul.f32 %v974, 1.442695
    %v976 = vpow.pop %v975
    %978 = vrot.lane.b32.xlu0 %v976, 94
    %v979 = vpop.permute.xlu0 %978
    %v981 = vsel %vm923, %v979, 0.0
    %982 = vadd.xlane.f32.xlu0 %v981
    %v983 = vpop.xlane.xlu0 %982
    %v984 = vrcp.pop %v983
    %v985 = vmul.f32 %v976, %v984
    %987 = vrot.lane.b32.xlu0 %v985, 103
    %v988 = vpop.permute.xlu0 %987
    %vm990 = vcmask 72704
    %v991 = vsel %vm990, %v963, %v988
    %v992 = vld [vmem:[#allocation3 + $0x208] sm:$0xff]
    %v993 = vld [vmem:[#allocation3 + $0x210] sm:$0xff]
    %v994 = vld [vmem:[#allocation3 + $0x218] sm:$0x3]
    %vm995 = vcmask 146432
    %v997 = vsel %vm995, %v991, 0
    %vm999 = vcmask 1041408
    %v1001 = vsel %vm999, %v994, 0
    %1003 = vmatprep.subr.mxu0 0.0
    %1004 = vmatpush1.msra.mxu0 %v992
    %1005 = vmatprep.subr.mxu0 0.0
    %1006 = vmatpush1.msra.mxu0 %v993
    %1007 = vmatprep.subr.mxu0 0.0
    %1008 = vmatpush1.msra.mxu0 %v1001
    %1009 = vmatprep.subr.mxu0 0.0
    %1010 = vmatpush1.msra.mxu0 0.0
    %1011 = vmatprep.subr.mxu0 0.0
    %1012 = vmatpush1.msra.mxu0 0.0
    %1013 = vmatprep.subr.mxu0 0.0
    %1014 = vmatpush1.msra.mxu0 0.0
    %1015 = vmatprep.subr.mxu0 0.0
    %1016 = vmatpush1.msra.mxu0 0.0
    %1017 = vmatprep.subr.mxu0 0.0
    %1018 = vmatpush1.msra.mxu0 0.0
    %1019 = vmatprep.subr.mxu0 0.0
    %1020 = vmatpush1.msra.mxu0 0.0
    %1021 = vmatprep.subr.mxu0 0.0
    %1022 = vmatpush1.msra.mxu0 0.0
    %1023 = vmatprep.subr.mxu0 0.0
    %1024 = vmatpush1.msra.mxu0 0.0
    %1025 = vmatprep.subr.mxu0 0.0
    %1026 = vmatpush1.msra.mxu0 0.0
    %1027 = vmatprep.subr.mxu0 0.0
    %1028 = vmatpush1.msra.mxu0 0.0
    %1029 = vmatprep.subr.mxu0 0.0
    %1030 = vmatpush1.msra.mxu0 0.0
    %1031 = vmatprep.subr.mxu0 0.0
    %1032 = vmatpush1.msra.mxu0 0.0
    %1033 = vmatprep.subr.mxu0 0.0
    %1034 = vmatpush1.msra.mxu0 0.0
    %1035 = vmatprep.subr.mxu0 0.0
    %1036 = vmatpush1.msra.mxu0 0.0
    %1037 = vmatprep.subr.mxu0 0.0
    %1038 = vmatpush1.msra.mxu0 0.0
    %1039 = vmatprep.subr.mxu0 0.0
    %1040 = vmatpush1.msra.mxu0 0.0
    %1041 = vmatprep.subr.mxu0 0.0
    %1042 = vmatpush1.msra.mxu0 0.0
    %1043 = vmatprep.subr.mxu0 0.0
    %1044 = vmatpush1.msra.mxu0 0.0
    %1045 = vmatprep.subr.mxu0 0.0
    %1046 = vmatpush1.msra.mxu0 0.0
    %1047 = vmatprep.subr.mxu0 0.0
    %1048 = vmatpush1.msra.mxu0 0.0
    %1049 = vmatprep.subr.mxu0 0.0
    %1050 = vmatpush1.msra.mxu0 0.0
    %1051 = vmatprep.subr.mxu0 0.0
    %1052 = vmatpush1.msra.mxu0 0.0
    %1053 = vmatprep.subr.mxu0 0.0
    %1054 = vmatpush1.msra.mxu0 0.0
    %1055 = vmatprep.subr.mxu0 0.0
    %1056 = vmatpush1.msra.mxu0 0.0
    %1057 = vmatprep.subr.mxu0 0.0
    %1058 = vmatpush1.msra.mxu0 0.0
    %1059 = vmatprep.subr.mxu0 0.0
    %1060 = vmatpush1.msra.mxu0 0.0
    %1061 = vmatprep.subr.mxu0 0.0
    %1062 = vmatpush1.msra.mxu0 0.0
    %1063 = vmatprep.subr.mxu0 0.0
    %1064 = vmatpush1.msra.mxu0 0.0
    %1065 = vmatprep.subr.mxu0 0.0
    %1066 = vmatpush1.msra.mxu0 0.0
    %1067 = vmatprep.mubr.f32.mxu0 0.0
    %1068 = vmatmul.mubr.f32.gmra.mrb[0].mxu0 %v997
    %v1069 = vpop.f32.mrb[0].mxu0
    %v1070 = vadd.f32 0.0, %v1069
    %v1071 = vpop.f32.mrb[0].mxu0
    %1072 = vdwg.mxu0
    %1074 = vrot.lane.b32.xlu0 %v1070, 9
    %v1075 = vpop.permute.xlu0 %1074
    %v1077 = vadd.f32 %v920, %v1075
    %vm1078 = vcmask 147528
    %v1079 = vsel %vm1078, %v1077, -inf
    %1080 = vmax.xlane.f32.xlu0 %v1079
    %v1081 = vpop.xlane.xlu0 %1080
    %v1082 = vsub.f32 %v1077, %v1081
    %v1083 = vmul.f32 %v1082, 1.442695
    %v1084 = vpow.pop %v1083
    %1086 = vrot.lane.b32.xlu0 %v1084, 119
    %v1087 = vpop.permute.xlu0 %1086
    %vm1089 = vcmask 73728
    %v1090 = vsel %vm1089, %v1087, 0.0
    %1091 = vadd.xlane.f32.xlu0 %v1090
    %v1092 = vpop.xlane.xlu0 %1091
    %v1093 = vrcp.pop %v1092
    %v1094 = vmul.f32 %v1084, %v1093
    %1095 = vrot.lane.b32.xlu0 %v1070, 18
    %v1096 = vpop.permute.xlu0 %1095
    %v1098 = vadd.f32 %v920, %v1096
    %vm1099 = vcmask 426328
    %v1100 = vsel %vm1099, %v1098, -inf
    %1101 = vmax.xlane.f32.xlu0 %v1100
    %v1102 = vpop.xlane.xlu0 %1101
    %v1103 = vsub.f32 %v1098, %v1102
    %v1104 = vmul.f32 %v1103, 1.442695
    %v1105 = vpow.pop %v1104
    %1107 = vrot.lane.b32.xlu0 %v1105, 85
    %v1108 = vpop.permute.xlu0 %1107
    %v1110 = vsel %vm1089, %v1108, 0.0
    %1111 = vadd.xlane.f32.xlu0 %v1110
    %v1112 = vpop.xlane.xlu0 %1111
    %v1113 = vrcp.pop %v1112
    %v1114 = vmul.f32 %v1105, %v1113
    %v1115 = vrot.slane %v844, 2
    %1116 = vrot.lane.b32.xlu0 %v1115, 9
    %v1117 = vpop.permute.xlu0 %1116
    %v1119 = vadd.f32 %v1094, %v1117
    %v1120 = vmul.f32 %v1119, 100.0
    %v1121 = vsel %vm1078, %v1120, -inf
    %1122 = vmax.xlane.f32.xlu0 %v1121
    %v1123 = vpop.xlane.xlu0 %1122
    %v1124 = vsub.f32 %v1120, %v1123
    %v1125 = vmul.f32 %v1124, 1.442695
    %v1126 = vpow.pop %v1125
    %1128 = vrot.lane.b32.xlu0 %v1126, 119
    %v1129 = vpop.permute.xlu0 %1128
    %v1131 = vsel %vm1089, %v1129, 0.0
    %1132 = vadd.xlane.f32.xlu0 %v1131
    %v1133 = vpop.xlane.xlu0 %1132
    %v1134 = vrcp.pop %v1133
    %v1135 = vmul.f32 %v1126, %v1134
    %v1136 = vrot.slane %v844, 3
    %1137 = vrot.lane.b32.xlu0 %v1136, 43
    %v1138 = vpop.permute.xlu0 %1137
    %v1140 = vadd.f32 %v1114, %v1138
    %v1141 = vmul.f32 %v1140, 100.0
    %v1142 = vsel %vm1099, %v1141, -inf
    %1143 = vmax.xlane.f32.xlu0 %v1142
    %v1144 = vpop.xlane.xlu0 %1143
    %v1145 = vsub.f32 %v1141, %v1144
    %v1146 = vmul.f32 %v1145, 1.442695
    %v1147 = vpow.pop %v1146
    %1149 = vrot.lane.b32.xlu0 %v1147, 85
    %v1150 = vpop.permute.xlu0 %1149
    %v1152 = vsel %vm1089, %v1150, 0.0
    %1153 = vadd.xlane.f32.xlu0 %v1152
    %v1154 = vpop.xlane.xlu0 %1153
    %v1155 = vrcp.pop %v1154
    %v1156 = vmul.f32 %v1147, %v1155
    %1158 = vrot.lane.b32.xlu0 %v1135, 119
    %v1159 = vpop.permute.xlu0 %1158
    %1162 = vrot.lane.b32.xlu0 %v1156, 95
    %v1163 = vpop.permute.xlu0 %1162
    %vm1165 = vcmask 80896
    %v1166 = vsel %vm1165, %v1159, %v1163
    %v1167 = vld [vmem:[#allocation3 + $0x220] sm:$0xff]
    %v1168 = vld [vmem:[#allocation3 + $0x228] sm:$0xff]
    %v1169 = vld [vmem:[#allocation3 + $0x230] sm:$0xf]
    %vm1170 = vcmask 162816
    %v1172 = vsel %vm1170, %v1166, 0
    %v1175 = vsel %vm265, %v1169, 0
    %1177 = vmatprep.subr.mxu0 0.0
    %1178 = vmatpush1.msra.mxu0 %v1167
    %1179 = vmatprep.subr.mxu0 0.0
    %1180 = vmatpush1.msra.mxu0 %v1168
    %1181 = vmatprep.subr.mxu0 0.0
    %1182 = vmatpush1.msra.mxu0 %v1175
    %1183 = vmatprep.subr.mxu0 0.0
    %1184 = vmatpush1.msra.mxu0 0.0
    %1185 = vmatprep.subr.mxu0 0.0
    %1186 = vmatpush1.msra.mxu0 0.0
    %1187 = vmatprep.subr.mxu0 0.0
    %1188 = vmatpush1.msra.mxu0 0.0
    %1189 = vmatprep.subr.mxu0 0.0
    %1190 = vmatpush1.msra.mxu0 0.0
    %1191 = vmatprep.subr.mxu0 0.0
    %1192 = vmatpush1.msra.mxu0 0.0
    %1193 = vmatprep.subr.mxu0 0.0
    %1194 = vmatpush1.msra.mxu0 0.0
    %1195 = vmatprep.subr.mxu0 0.0
    %1196 = vmatpush1.msra.mxu0 0.0
    %1197 = vmatprep.subr.mxu0 0.0
    %1198 = vmatpush1.msra.mxu0 0.0
    %1199 = vmatprep.subr.mxu0 0.0
    %1200 = vmatpush1.msra.mxu0 0.0
    %1201 = vmatprep.subr.mxu0 0.0
    %1202 = vmatpush1.msra.mxu0 0.0
    %1203 = vmatprep.subr.mxu0 0.0
    %1204 = vmatpush1.msra.mxu0 0.0
    %1205 = vmatprep.subr.mxu0 0.0
    %1206 = vmatpush1.msra.mxu0 0.0
    %1207 = vmatprep.subr.mxu0 0.0
    %1208 = vmatpush1.msra.mxu0 0.0
    %1209 = vmatprep.subr.mxu0 0.0
    %1210 = vmatpush1.msra.mxu0 0.0
    %1211 = vmatprep.subr.mxu0 0.0
    %1212 = vmatpush1.msra.mxu0 0.0
    %1213 = vmatprep.subr.mxu0 0.0
    %1214 = vmatpush1.msra.mxu0 0.0
    %1215 = vmatprep.subr.mxu0 0.0
    %1216 = vmatpush1.msra.mxu0 0.0
    %1217 = vmatprep.subr.mxu0 0.0
    %1218 = vmatpush1.msra.mxu0 0.0
    %1219 = vmatprep.subr.mxu0 0.0
    %1220 = vmatpush1.msra.mxu0 0.0
    %1221 = vmatprep.subr.mxu0 0.0
    %1222 = vmatpush1.msra.mxu0 0.0
    %1223 = vmatprep.subr.mxu0 0.0
    %1224 = vmatpush1.msra.mxu0 0.0
    %1225 = vmatprep.subr.mxu0 0.0
    %1226 = vmatpush1.msra.mxu0 0.0
    %1227 = vmatprep.subr.mxu0 0.0
    %1228 = vmatpush1.msra.mxu0 0.0
    %1229 = vmatprep.subr.mxu0 0.0
    %1230 = vmatpush1.msra.mxu0 0.0
    %1231 = vmatprep.subr.mxu0 0.0
    %1232 = vmatpush1.msra.mxu0 0.0
    %1233 = vmatprep.subr.mxu0 0.0
    %1234 = vmatpush1.msra.mxu0 0.0
    %1235 = vmatprep.subr.mxu0 0.0
    %1236 = vmatpush1.msra.mxu0 0.0
    %1237 = vmatprep.subr.mxu0 0.0
    %1238 = vmatpush1.msra.mxu0 0.0
    %1239 = vmatprep.subr.mxu0 0.0
    %1240 = vmatpush1.msra.mxu0 0.0
    %1241 = vmatprep.mubr.f32.mxu0 0.0
    %1242 = vmatmul.mubr.f32.gmra.mrb[0].mxu0 %v1172
    %v1243 = vpop.f32.mrb[0].mxu0
    %v1244 = vadd.f32 0.0, %v1243
    %v1245 = vpop.f32.mrb[0].mxu0
    %1246 = vdwg.mxu0
    %1248 = vrot.lane.b32.xlu0 %v1244, 19
    %v1249 = vpop.permute.xlu0 %1248
    %v1251 = vadd.f32 %v1077, %v1249
    %vm1252 = vcmask 229528
    %v1253 = vsel %vm1252, %v1251, -inf
    %1254 = vmax.xlane.f32.xlu0 %v1253
    %v1255 = vpop.xlane.xlu0 %1254
    %v1256 = vsub.f32 %v1251, %v1255
    %v1257 = vmul.f32 %v1256, 1.442695
    %v1258 = vpow.pop %v1257
    %1260 = vrot.lane.b32.xlu0 %v1258, 109
    %v1261 = vpop.permute.xlu0 %1260
    %v1263 = vsel %vm1089, %v1261, 0.0
    %1264 = vadd.xlane.f32.xlu0 %v1263
    %v1265 = vpop.xlane.xlu0 %1264
    %v1266 = vrcp.pop %v1265
    %v1267 = vmul.f32 %v1258, %v1266
    %vm1268 = vcmask 270568
    %v1269 = vsel %vm1268, %v1251, -inf
    %1270 = vmax.xlane.f32.xlu0 %v1269
    %v1271 = vpop.xlane.xlu0 %1270
    %v1272 = vsub.f32 %v1251, %v1271
    %v1273 = vmul.f32 %v1272, 1.442695
    %v1274 = vpow.pop %v1273
    %1276 = vrot.lane.b32.xlu0 %v1274, 99
    %v1277 = vpop.permute.xlu0 %1276
    %vm1279 = vcmask 32768
    %v1280 = vsel %vm1279, %v1277, 0.0
    %1281 = vadd.xlane.f32.xlu0 %v1280
    %v1282 = vpop.xlane.xlu0 %1281
    %v1283 = vrcp.pop %v1282
    %v1284 = vmul.f32 %v1274, %v1283
    %1285 = vrot.lane.b32.xlu0 %v1244, 38
    %v1286 = vpop.permute.xlu0 %1285
    %v1288 = vadd.f32 %v1098, %v1286
    %vm1289 = vcmask 508328
    %v1290 = vsel %vm1289, %v1288, -inf
    %1291 = vmax.xlane.f32.xlu0 %v1290
    %v1292 = vpop.xlane.xlu0 %1291
    %v1293 = vsub.f32 %v1288, %v1292
    %v1294 = vmul.f32 %v1293, 1.442695
    %v1295 = vpow.pop %v1294
    %1297 = vrot.lane.b32.xlu0 %v1295, 75
    %v1298 = vpop.permute.xlu0 %1297
    %v1300 = vsel %vm1089, %v1298, 0.0
    %1301 = vadd.xlane.f32.xlu0 %v1300
    %v1302 = vpop.xlane.xlu0 %1301
    %v1303 = vrcp.pop %v1302
    %v1304 = vmul.f32 %v1295, %v1303
    %vm1305 = vcmask 549368
    %v1306 = vsel %vm1305, %v1288, -inf
    %1307 = vmax.xlane.f32.xlu0 %v1306
    %v1308 = vpop.xlane.xlu0 %1307
    %v1309 = vsub.f32 %v1288, %v1308
    %v1310 = vmul.f32 %v1309, 1.442695
    %v1311 = vpow.pop %v1310
    %1313 = vrot.lane.b32.xlu0 %v1311, 65
    %v1314 = vpop.permute.xlu0 %1313
    %v1316 = vsel %vm1279, %v1314, 0.0
    %1317 = vadd.xlane.f32.xlu0 %v1316
    %v1318 = vpop.xlane.xlu0 %1317
    %v1319 = vrcp.pop %v1318
    %v1320 = vmul.f32 %v1311, %v1319
    %1321 = vst [vmem:[%s7] sm:$0xff] 0.0
    %1322 = vst [vmem:[%s7 + $0x8] sm:$0xff] 0.0
    %1323 = vst.msk [vmem:[%s7] sm:$0x1] %vm923, %v934
    %1325 = vrot.lane.b32.xlu0 %v1094, 119
    %v1326 = vpop.permute.xlu0 %1325
    %1328 = vst.msk [vmem:[%s7 + $0x1] sm:$0x1] %vm1089, %v1326
    %1330 = vrot.lane.b32.xlu0 %v1267, 109
    %v1331 = vpop.permute.xlu0 %1330
    %1333 = vst.msk [vmem:[%s7 + $0x2] sm:$0x1] %vm1089, %v1331
    %1335 = vrot.lane.b32.xlu0 %v1284, 99
    %v1336 = vpop.permute.xlu0 %1335
    %1338 = vst.msk [vmem:[%s7 + $0x3] sm:$0x1] %vm1279, %v1336
    %1340 = vrot.lane.b32.xlu0 %v950, 94
    %v1341 = vpop.permute.xlu0 %1340
    %1343 = vst.msk [vmem:[%s7 + $0x4] sm:$0x1] %vm923, %v1341
    %1345 = vrot.lane.b32.xlu0 %v1114, 85
    %v1346 = vpop.permute.xlu0 %1345
    %1348 = vst.msk [vmem:[%s7 + $0x5] sm:$0x1] %vm1089, %v1346
    %1350 = vrot.lane.b32.xlu0 %v1304, 75
    %v1351 = vpop.permute.xlu0 %1350
    %1353 = vst.msk [vmem:[%s7 + $0x6] sm:$0x1] %vm1089, %v1351
    %1355 = vrot.lane.b32.xlu0 %v1320, 65
    %v1356 = vpop.permute.xlu0 %1355
    %1358 = vst.msk [vmem:[%s7 + $0x7] sm:$0x1] %vm1279, %v1356
    %1359 = vrot.lane.b32.xlu0 %v737, 32
    %v1360 = vpop.permute.xlu0 %1359
    %1362 = vst.msk [vmem:[%s7 + $0x8] sm:$0x1] %vm560, %v1360
    %1364 = vrot.lane.b32.xlu0 %v731, 96
    %v1365 = vpop.permute.xlu0 %1364
    %1367 = vst.msk [vmem:[%s7 + $0x9] sm:$0x1] %vm560, %v1365
    // Predicated region
    $region34: #{ggcn_forward.1} parent=1 // pred_check
      _
    $region35: #{ggcn_forward.1} parent=1 // pred_check_branch
      %1369 = sbr.rel (0) target = $region37
    $region36: #{ggcn_forward.1} parent=1 // pred_region
      _
    $region37: #{ggcn_forward.1} parent=1 // pred_fallthru
      _
    // Predicated region
    $region38: #{ggcn_forward.1} parent=1 // pred_check
      _
    $region39: #{ggcn_forward.1} parent=1 // pred_check_branch
      %1371 = sbr.rel (0) target = $region41
    $region40: #{ggcn_forward.1} parent=1 // pred_region
      _
    $region41: #{ggcn_forward.1} parent=1 // pred_fallthru
      _
    %1372 = vsyncpa [#allocation4], 1

</llo_original>
